<compile_context>
chip_gen: v5e
topology: v5e:2x2
jax: 0.10.0
libtpu: 0.0.40
codegen_flags: <defaults>
</compile_context>

<pallas_src>
import jax
import jax.numpy as jnp
from jax.experimental import pallas as pl
from jax.experimental.pallas import tpu as pltpu

MXU_DTYPE = jnp.bfloat16  # matmul-operand dtype (accumulation is always f32)


def _round_up(x, m):
    return -(-x // m) * m


def _tap_stack(h, k, d):
    """h: (L, C). Returns (L, k*C) where block m holds h[t - m*d] (causal, zero-filled)."""
    L, C = h.shape
    pad = (k - 1) * d
    pad8 = _round_up(pad, 8)  # sublane-aligned over-pad
    hp = jnp.concatenate([jnp.zeros((pad8, C), h.dtype), h], axis=0)
    return jnp.concatenate(
        [hp[pad8 - m * d: pad8 - m * d + L, :] for m in range(k)], axis=1)


def _make_fused_kernel(k, layer_cfgs, mxu_dtype):
    """Fused TemporalConvNet stack. layer_cfgs: per-layer dilation / has_downsample."""

    def kernel(x_ref, *refs):
        out_ref = refs[-1]
        wrefs = refs[:-1]
        h = x_ref[0]                                   # (L8, C0_p) f32
        i = 0
        for cfg in layer_cfgs:
            d = cfg["dilation"]
            w1 = wrefs[i][...]; b1 = wrefs[i + 1][...]  # (k*Cin_p, Cout_p), (1, Cout_p)
            w2 = wrefs[i + 2][...]; b2 = wrefs[i + 3][...]
            i += 4
            res = h
            # conv1: single MXU matmul over the tap-stacked operand, +bias, ReLU
            y1 = jnp.maximum(
                jnp.dot(_tap_stack(h, k, d).astype(mxu_dtype), w1,
                        preferred_element_type=jnp.float32) + b1, 0.0)
            # conv2
            y2 = jnp.maximum(
                jnp.dot(_tap_stack(y1, k, d).astype(mxu_dtype), w2,
                        preferred_element_type=jnp.float32) + b2, 0.0)
            # residual: 1x1 downsample only when channel counts differ
            if cfg["has_downsample"]:
                wd = wrefs[i][...]; bd = wrefs[i + 1][...]
                i += 2
                res = jnp.dot(res.astype(mxu_dtype), wd,
                              preferred_element_type=jnp.float32) + bd
            h = jnp.maximum(y2 + res, 0.0)
        out_ref[0] = h.astype(out_ref.dtype)

    return kernel


# -------------------------- parameter handling --------------------------

def init_encoder_tcn_params(key, input_size, num_channels, kernel_size):
    """Deterministic init mirroring TemporalBlock.init_weights (N(0, 0.01)).

    weight_norm is applied explicitly: w = g * v / ||v|| with g initialized to
    ||v|| (PyTorch's init), so the effective weight equals the raw draw here,
    but the same code path works for trained g/v.
    """
    params = []
    cin = input_size
    for i, cout in enumerate(num_channels):
        key, k1, k2, k3, k4, k5, k6 = jax.random.split(key, 7)
        v1 = 0.01 * jax.random.normal(k1, (cout, cin, kernel_size), jnp.float32)
        v2 = 0.01 * jax.random.normal(k2, (cout, cout, kernel_size), jnp.float32)
        n1 = jnp.sqrt(jnp.sum(v1 * v1, axis=(1, 2), keepdims=True))
        n2 = jnp.sqrt(jnp.sum(v2 * v2, axis=(1, 2), keepdims=True))
        g1, g2 = n1, n2                      # weight_norm init: g = ||v||
        w1 = g1 * v1 / n1                    # effective weight (== v1 at init)
        w2 = g2 * v2 / n2
        b1 = 0.01 * jax.random.normal(k3, (cout,), jnp.float32)
        b2 = 0.01 * jax.random.normal(k4, (cout,), jnp.float32)
        if cin != cout:
            wd = 0.01 * jax.random.normal(k5, (cout, cin), jnp.float32)
            bd = 0.01 * jax.random.normal(k6, (cout,), jnp.float32)
        else:
            wd, bd = None, None
        params.append(dict(w1=w1, b1=b1, w2=w2, b2=b2, wd=wd, bd=bd,
                           dilation=2 ** i))
        cin = cout
    return params


def prepare_kernel_params(raw_params, kernel_size, input_size, mxu_dtype=MXU_DTYPE):
    """Lane-pad channels to multiples of 128 and build tap-stacked (k*Cin, Cout)
    matmul weights (bf16). Biases stay f32. Identity residuals carry no weights."""
    k = kernel_size
    kparams = []
    cin = input_size
    for p in raw_params:
        cout = p["w1"].shape[0]
        cin_p = _round_up(cin, 128)
        cout_p = _round_up(cout, 128)
        w1s = jnp.zeros((k * cin_p, cout_p), jnp.float32)
        w2s = jnp.zeros((k * cout_p, cout_p), jnp.float32)
        for m in range(k):   # tap m (lookback m*dilation) uses PyTorch tap k-1-m
            w1s = w1s.at[m * cin_p:m * cin_p + cin, :cout].set(p["w1"][:, :, k - 1 - m].T)
            w2s = w2s.at[m * cout_p:m * cout_p + cout, :cout].set(p["w2"][:, :, k - 1 - m].T)
        b1 = jnp.zeros((1, cout_p), jnp.float32).at[0, :cout].set(p["b1"])
        b2 = jnp.zeros((1, cout_p), jnp.float32).at[0, :cout].set(p["b2"])
        if p["wd"] is not None:
            wd = jnp.zeros((cin_p, cout_p), jnp.float32).at[:cin, :cout].set(p["wd"].T)
            wd = wd.astype(mxu_dtype)
            bd = jnp.zeros((1, cout_p), jnp.float32).at[0, :cout].set(p["bd"])
        else:
            wd, bd = None, None
        kparams.append(dict(w1=w1s.astype(mxu_dtype), b1=b1,
                            w2=w2s.astype(mxu_dtype), b2=b2,
                            wd=wd, bd=bd, dilation=p["dilation"],
                            cin=cin, cout=cout, cin_p=cin_p, cout_p=cout_p))
        cin = cout
    return kparams


# -------------------------- fused forward --------------------------

def encoder_tcn_forward(x, kparams, kernel_size):
    """x: (N, L, C_in) -> (N, L, num_channels[-1]); whole TCN stack in one pallas_call."""
    N, L, cin = x.shape
    k = kernel_size
    cin_p = kparams[0]["cin_p"]
    cout_last = kparams[-1]["cout"]
    cout_last_p = kparams[-1]["cout_p"]
    L8 = _round_up(L, 8)
    xp = jnp.zeros((N, L8, cin_p), jnp.float32).at[:, :L, :cin].set(x)

    cfgs = [dict(dilation=p["dilation"], has_downsample=p["wd"] is not None)
            for p in kparams]
    kernel = _make_fused_kernel(k, cfgs, MXU_DTYPE)

    flat = [xp]
    in_specs = [pl.BlockSpec((1, L8, cin_p), lambda n: (n, 0, 0))]
    for p in kparams:
        for name in ("w1", "b1", "w2", "b2"):
            a = p[name]
            flat.append(a)
            in_specs.append(pl.BlockSpec(a.shape, lambda n: (0, 0)))
        if p["wd"] is not None:
            for name in ("wd", "bd"):
                a = p[name]
                flat.append(a)
                in_specs.append(pl.BlockSpec(a.shape, lambda n: (0, 0)))

    out = pl.pallas_call(
        kernel,
        out_shape=jax.ShapeDtypeStruct((N, L8, cout_last_p), jnp.float32),
        grid_spec=pltpu.PrefetchScalarGridSpec(
            num_scalar_prefetch=0,
            grid=(N,),                                   # parallel over batch
            in_specs=in_specs,
            out_specs=pl.BlockSpec((1, L8, cout_last_p), lambda n: (n, 0, 0)),
        ),
        compiler_params=pltpu.CompilerParams(
            dimension_semantics=("parallel",),
            vmem_limit_bytes=32 * 1024 * 1024),
    )(*flat)
    return out[:, :L, :cout_last]


# -------------- pure-JAX reference (same bf16-operand semantics) --------------

def _causal_conv_ref(x, w_pt, b, dilation, mxu_dtype):
    """x: (N, L, Cin) f32; w_pt: (Cout, Cin, K) PyTorch layout; b: (Cout,)."""
    k = w_pt.shape[2]
    pad = (k - 1) * dilation
    L = x.shape[1]
    xp = jnp.pad(x, ((0, 0), (pad, 0), (0, 0)))
    acc = jnp.zeros((x.shape[0], L, w_pt.shape[0]), jnp.float32)
    for m in range(k):
        s = pad - m * dilation
        wm = jnp.transpose(w_pt[:, :, k - 1 - m])        # (Cin, Cout)
        acc = acc + jnp.einsum("nlc,co->nlo",
                               xp[:, s:s + L, :].astype(mxu_dtype),
                               wm.astype(mxu_dtype),
                               preferred_element_type=jnp.float32)
    return acc + b


def encoder_tcn_ref(x, raw_params, mxu_dtype=MXU_DTYPE):
    o = x
    for p in raw_params:
        y1 = jax.nn.relu(_causal_conv_ref(o, p["w1"], p["b1"], p["dilation"], mxu_dtype))
        y2 = jax.nn.relu(_causal_conv_ref(y1, p["w2"], p["b2"], p["dilation"], mxu_dtype))
        if p["wd"] is not None:
            res = jnp.einsum("nlc,co->nlo", o.astype(mxu_dtype),
                             p["wd"].T.astype(mxu_dtype),
                             preferred_element_type=jnp.float32) + p["bd"]
        else:
            res = o
        o = jax.nn.relu(y2 + res)
    return o


if __name__ == "__main__":
    # Small shapes consistent with Encoder_TCN:
    N, L = 2, 16
    input_size = 4
    num_channels = [8, 8, 12]   # dilations 1, 2, 4; mixes downsample + identity residual
    kernel_size = 3
    # dropout = 0.1  (identity at inference — see TODO at top)

    key = jax.random.PRNGKey(0)
    kx, kp = jax.random.split(key)
    x = jax.random.normal(kx, (N, L, input_size), jnp.float32)   # (N, L_in, C_in)

    raw_params = init_encoder_tcn_params(kp, input_size, num_channels, kernel_size)
    kparams = prepare_kernel_params(raw_params, kernel_size, input_size)

    out = jax.block_until_ready(encoder_tcn_forward(x, kparams, kernel_size))
    ref = encoder_tcn_ref(x, raw_params)

    assert out.shape == (N, L, num_channels[-1]), out.shape
    assert jnp.allclose(out, ref, atol=1e-4, rtol=1e-3), "kernel/reference mismatch"
    print("KERNEL_OK")
</pallas_src>

<mosaic_0001>
module attributes {stable_mosaic.version = 11 : i64} {
  func.func @kernel(%arg0: i32, %arg1: memref<1x16x128xf32, #tpu.memory_space<vmem>>, %arg2: memref<384x128xbf16, #tpu.memory_space<vmem>>, %arg3: memref<1x128xf32, #tpu.memory_space<vmem>>, %arg4: memref<384x128xbf16, #tpu.memory_space<vmem>>, %arg5: memref<1x128xf32, #tpu.memory_space<vmem>>, %arg6: memref<128x128xbf16, #tpu.memory_space<vmem>>, %arg7: memref<1x128xf32, #tpu.memory_space<vmem>>, %arg8: memref<384x128xbf16, #tpu.memory_space<vmem>>, %arg9: memref<1x128xf32, #tpu.memory_space<vmem>>, %arg10: memref<384x128xbf16, #tpu.memory_space<vmem>>, %arg11: memref<1x128xf32, #tpu.memory_space<vmem>>, %arg12: memref<384x128xbf16, #tpu.memory_space<vmem>>, %arg13: memref<1x128xf32, #tpu.memory_space<vmem>>, %arg14: memref<384x128xbf16, #tpu.memory_space<vmem>>, %arg15: memref<1x128xf32, #tpu.memory_space<vmem>>, %arg16: memref<128x128xbf16, #tpu.memory_space<vmem>>, %arg17: memref<1x128xf32, #tpu.memory_space<vmem>>, %arg18: memref<1x16x128xf32, #tpu.memory_space<vmem>>) attributes {dimension_semantics = [#tpu.dimension_semantics<parallel>], iteration_bounds = array<i64: 2>, scalar_prefetch = 0 : i64, scratch_operands = 0 : i64, tpu.core_type = #tpu.core_type<tc>, window_params = [{transform_indices = @transform_0, window_bounds = array<i64: 1, 16, 128>}, {pipeline_mode = #tpu.pipeline_mode<synchronous>, transform_indices = @transform_1, window_bounds = array<i64: 384, 128>}, {pipeline_mode = #tpu.pipeline_mode<synchronous>, transform_indices = @transform_2, window_bounds = array<i64: 1, 128>}, {pipeline_mode = #tpu.pipeline_mode<synchronous>, transform_indices = @transform_3, window_bounds = array<i64: 384, 128>}, {pipeline_mode = #tpu.pipeline_mode<synchronous>, transform_indices = @transform_4, window_bounds = array<i64: 1, 128>}, {pipeline_mode = #tpu.pipeline_mode<synchronous>, transform_indices = @transform_5, window_bounds = array<i64: 128, 128>}, {pipeline_mode = #tpu.pipeline_mode<synchronous>, transform_indices = @transform_6, window_bounds = array<i64: 1, 128>}, {pipeline_mode = #tpu.pipeline_mode<synchronous>, transform_indices = @transform_7, window_bounds = array<i64: 384, 128>}, {pipeline_mode = #tpu.pipeline_mode<synchronous>, transform_indices = @transform_8, window_bounds = array<i64: 1, 128>}, {pipeline_mode = #tpu.pipeline_mode<synchronous>, transform_indices = @transform_9, window_bounds = array<i64: 384, 128>}, {pipeline_mode = #tpu.pipeline_mode<synchronous>, transform_indices = @transform_10, window_bounds = array<i64: 1, 128>}, {pipeline_mode = #tpu.pipeline_mode<synchronous>, transform_indices = @transform_11, window_bounds = array<i64: 384, 128>}, {pipeline_mode = #tpu.pipeline_mode<synchronous>, transform_indices = @transform_12, window_bounds = array<i64: 1, 128>}, {pipeline_mode = #tpu.pipeline_mode<synchronous>, transform_indices = @transform_13, window_bounds = array<i64: 384, 128>}, {pipeline_mode = #tpu.pipeline_mode<synchronous>, transform_indices = @transform_14, window_bounds = array<i64: 1, 128>}, {pipeline_mode = #tpu.pipeline_mode<synchronous>, transform_indices = @transform_15, window_bounds = array<i64: 128, 128>}, {pipeline_mode = #tpu.pipeline_mode<synchronous>, transform_indices = @transform_16, window_bounds = array<i64: 1, 128>}, {transform_indices = @transform_17, window_bounds = array<i64: 1, 16, 128>}]} {
    %c0 = arith.constant 0 : index
    %c0_0 = arith.constant 0 : index
    %c0_1 = arith.constant 0 : index
    %0 = vector.load %arg1[%c0, %c0_0, %c0_1] : memref<1x16x128xf32, #tpu.memory_space<vmem>>, vector<1x16x128xf32>
    %1 = vector.shape_cast %0 : vector<1x16x128xf32> to vector<16x128xf32>
    %c0_2 = arith.constant 0 : index
    %c0_3 = arith.constant 0 : index
    %2 = vector.load %arg2[%c0_2, %c0_3] : memref<384x128xbf16, #tpu.memory_space<vmem>>, vector<384x128xbf16>
    %c0_4 = arith.constant 0 : index
    %c0_5 = arith.constant 0 : index
    %3 = vector.load %arg3[%c0_4, %c0_5] : memref<1x128xf32, #tpu.memory_space<vmem>>, vector<1x128xf32>
    %c0_6 = arith.constant 0 : index
    %c0_7 = arith.constant 0 : index
    %4 = vector.load %arg4[%c0_6, %c0_7] : memref<384x128xbf16, #tpu.memory_space<vmem>>, vector<384x128xbf16>
    %c0_8 = arith.constant 0 : index
    %c0_9 = arith.constant 0 : index
    %5 = vector.load %arg5[%c0_8, %c0_9] : memref<1x128xf32, #tpu.memory_space<vmem>>, vector<1x128xf32>
    %cst = arith.constant 0.000000e+00 : f32
    %6 = vector.broadcast %cst : f32 to vector<8x128xf32>
    %7 = tpu.concatenate %6, %1 in 0 : vector<8x128xf32>, vector<16x128xf32> -> vector<24x128xf32>
    %8 = vector.extract_strided_slice %7 {offsets = [8, 0], sizes = [16, 128], strides = [1, 1]} : vector<24x128xf32> to vector<16x128xf32>
    %9 = vector.extract_strided_slice %7 {offsets = [7, 0], sizes = [16, 128], strides = [1, 1]} : vector<24x128xf32> to vector<16x128xf32>
    %10 = vector.extract_strided_slice %7 {offsets = [6, 0], sizes = [16, 128], strides = [1, 1]} : vector<24x128xf32> to vector<16x128xf32>
    %11 = tpu.concatenate %8, %9, %10 in 1 : vector<16x128xf32>, vector<16x128xf32>, vector<16x128xf32> -> vector<16x384xf32>
    %12 = arith.truncf %11 : vector<16x384xf32> to vector<16x384xbf16>
    %cst_10 = arith.constant dense<0.000000e+00> : vector<16x128xf32>
    %13 = tpu.matmul %12, %2, %cst_10 {dimension_numbers = #tpu.dot_dimension_numbers<[1], [0], [0], [1], [0, 0, 1, 1], [], []>} : vector<16x384xbf16>, vector<384x128xbf16>, vector<16x128xf32> -> vector<16x128xf32>
    %14 = vector.broadcast %3 : vector<1x128xf32> to vector<16x128xf32>
    %15 = arith.addf %13, %14 : vector<16x128xf32>
    %cst_11 = arith.constant 0.000000e+00 : f32
    %16 = vector.broadcast %cst_11 : f32 to vector<16x128xf32>
    %17 = arith.maximumf %15, %16 : vector<16x128xf32>
    %cst_12 = arith.constant 0.000000e+00 : f32
    %18 = vector.broadcast %cst_12 : f32 to vector<8x128xf32>
    %19 = tpu.concatenate %18, %17 in 0 : vector<8x128xf32>, vector<16x128xf32> -> vector<24x128xf32>
    %20 = vector.extract_strided_slice %19 {offsets = [8, 0], sizes = [16, 128], strides = [1, 1]} : vector<24x128xf32> to vector<16x128xf32>
    %21 = vector.extract_strided_slice %19 {offsets = [7, 0], sizes = [16, 128], strides = [1, 1]} : vector<24x128xf32> to vector<16x128xf32>
    %22 = vector.extract_strided_slice %19 {offsets = [6, 0], sizes = [16, 128], strides = [1, 1]} : vector<24x128xf32> to vector<16x128xf32>
    %23 = tpu.concatenate %20, %21, %22 in 1 : vector<16x128xf32>, vector<16x128xf32>, vector<16x128xf32> -> vector<16x384xf32>
    %24 = arith.truncf %23 : vector<16x384xf32> to vector<16x384xbf16>
    %cst_13 = arith.constant dense<0.000000e+00> : vector<16x128xf32>
    %25 = tpu.matmul %24, %4, %cst_13 {dimension_numbers = #tpu.dot_dimension_numbers<[1], [0], [0], [1], [0, 0, 1, 1], [], []>} : vector<16x384xbf16>, vector<384x128xbf16>, vector<16x128xf32> -> vector<16x128xf32>
    %26 = vector.broadcast %5 : vector<1x128xf32> to vector<16x128xf32>
    %27 = arith.addf %25, %26 : vector<16x128xf32>
    %cst_14 = arith.constant 0.000000e+00 : f32
    %28 = vector.broadcast %cst_14 : f32 to vector<16x128xf32>
    %29 = arith.maximumf %27, %28 : vector<16x128xf32>
    %c0_15 = arith.constant 0 : index
    %c0_16 = arith.constant 0 : index
    %30 = vector.load %arg6[%c0_15, %c0_16] : memref<128x128xbf16, #tpu.memory_space<vmem>>, vector<128x128xbf16>
    %c0_17 = arith.constant 0 : index
    %c0_18 = arith.constant 0 : index
    %31 = vector.load %arg7[%c0_17, %c0_18] : memref<1x128xf32, #tpu.memory_space<vmem>>, vector<1x128xf32>
    %32 = arith.truncf %1 : vector<16x128xf32> to vector<16x128xbf16>
    %cst_19 = arith.constant dense<0.000000e+00> : vector<16x128xf32>
    %33 = tpu.matmul %32, %30, %cst_19 {dimension_numbers = #tpu.dot_dimension_numbers<[1], [0], [0], [1], [0, 0, 1, 1], [], []>} : vector<16x128xbf16>, vector<128x128xbf16>, vector<16x128xf32> -> vector<16x128xf32>
    %34 = vector.broadcast %31 : vector<1x128xf32> to vector<16x128xf32>
    %35 = arith.addf %33, %34 : vector<16x128xf32>
    %36 = arith.addf %29, %35 : vector<16x128xf32>
    %cst_20 = arith.constant 0.000000e+00 : f32
    %37 = vector.broadcast %cst_20 : f32 to vector<16x128xf32>
    %38 = arith.maximumf %36, %37 : vector<16x128xf32>
    %c0_21 = arith.constant 0 : index
    %c0_22 = arith.constant 0 : index
    %39 = vector.load %arg8[%c0_21, %c0_22] : memref<384x128xbf16, #tpu.memory_space<vmem>>, vector<384x128xbf16>
    %c0_23 = arith.constant 0 : index
    %c0_24 = arith.constant 0 : index
    %40 = vector.load %arg9[%c0_23, %c0_24] : memref<1x128xf32, #tpu.memory_space<vmem>>, vector<1x128xf32>
    %c0_25 = arith.constant 0 : index
    %c0_26 = arith.constant 0 : index
    %41 = vector.load %arg10[%c0_25, %c0_26] : memref<384x128xbf16, #tpu.memory_space<vmem>>, vector<384x128xbf16>
    %c0_27 = arith.constant 0 : index
    %c0_28 = arith.constant 0 : index
    %42 = vector.load %arg11[%c0_27, %c0_28] : memref<1x128xf32, #tpu.memory_space<vmem>>, vector<1x128xf32>
    %cst_29 = arith.constant 0.000000e+00 : f32
    %43 = vector.broadcast %cst_29 : f32 to vector<8x128xf32>
    %44 = tpu.concatenate %43, %38 in 0 : vector<8x128xf32>, vector<16x128xf32> -> vector<24x128xf32>
    %45 = vector.extract_strided_slice %44 {offsets = [8, 0], sizes = [16, 128], strides = [1, 1]} : vector<24x128xf32> to vector<16x128xf32>
    %46 = vector.extract_strided_slice %44 {offsets = [6, 0], sizes = [16, 128], strides = [1, 1]} : vector<24x128xf32> to vector<16x128xf32>
    %47 = vector.extract_strided_slice %44 {offsets = [4, 0], sizes = [16, 128], strides = [1, 1]} : vector<24x128xf32> to vector<16x128xf32>
    %48 = tpu.concatenate %45, %46, %47 in 1 : vector<16x128xf32>, vector<16x128xf32>, vector<16x128xf32> -> vector<16x384xf32>
    %49 = arith.truncf %48 : vector<16x384xf32> to vector<16x384xbf16>
    %cst_30 = arith.constant dense<0.000000e+00> : vector<16x128xf32>
    %50 = tpu.matmul %49, %39, %cst_30 {dimension_numbers = #tpu.dot_dimension_numbers<[1], [0], [0], [1], [0, 0, 1, 1], [], []>} : vector<16x384xbf16>, vector<384x128xbf16>, vector<16x128xf32> -> vector<16x128xf32>
    %51 = vector.broadcast %40 : vector<1x128xf32> to vector<16x128xf32>
    %52 = arith.addf %50, %51 : vector<16x128xf32>
    %cst_31 = arith.constant 0.000000e+00 : f32
    %53 = vector.broadcast %cst_31 : f32 to vector<16x128xf32>
    %54 = arith.maximumf %52, %53 : vector<16x128xf32>
    %cst_32 = arith.constant 0.000000e+00 : f32
    %55 = vector.broadcast %cst_32 : f32 to vector<8x128xf32>
    %56 = tpu.concatenate %55, %54 in 0 : vector<8x128xf32>, vector<16x128xf32> -> vector<24x128xf32>
    %57 = vector.extract_strided_slice %56 {offsets = [8, 0], sizes = [16, 128], strides = [1, 1]} : vector<24x128xf32> to vector<16x128xf32>
    %58 = vector.extract_strided_slice %56 {offsets = [6, 0], sizes = [16, 128], strides = [1, 1]} : vector<24x128xf32> to vector<16x128xf32>
    %59 = vector.extract_strided_slice %56 {offsets = [4, 0], sizes = [16, 128], strides = [1, 1]} : vector<24x128xf32> to vector<16x128xf32>
    %60 = tpu.concatenate %57, %58, %59 in 1 : vector<16x128xf32>, vector<16x128xf32>, vector<16x128xf32> -> vector<16x384xf32>
    %61 = arith.truncf %60 : vector<16x384xf32> to vector<16x384xbf16>
    %cst_33 = arith.constant dense<0.000000e+00> : vector<16x128xf32>
    %62 = tpu.matmul %61, %41, %cst_33 {dimension_numbers = #tpu.dot_dimension_numbers<[1], [0], [0], [1], [0, 0, 1, 1], [], []>} : vector<16x384xbf16>, vector<384x128xbf16>, vector<16x128xf32> -> vector<16x128xf32>
    %63 = vector.broadcast %42 : vector<1x128xf32> to vector<16x128xf32>
    %64 = arith.addf %62, %63 : vector<16x128xf32>
    %cst_34 = arith.constant 0.000000e+00 : f32
    %65 = vector.broadcast %cst_34 : f32 to vector<16x128xf32>
    %66 = arith.maximumf %64, %65 : vector<16x128xf32>
    %67 = arith.addf %66, %38 : vector<16x128xf32>
    %cst_35 = arith.constant 0.000000e+00 : f32
    %68 = vector.broadcast %cst_35 : f32 to vector<16x128xf32>
    %69 = arith.maximumf %67, %68 : vector<16x128xf32>
    %c0_36 = arith.constant 0 : index
    %c0_37 = arith.constant 0 : index
    %70 = vector.load %arg12[%c0_36, %c0_37] : memref<384x128xbf16, #tpu.memory_space<vmem>>, vector<384x128xbf16>
    %c0_38 = arith.constant 0 : index
    %c0_39 = arith.constant 0 : index
    %71 = vector.load %arg13[%c0_38, %c0_39] : memref<1x128xf32, #tpu.memory_space<vmem>>, vector<1x128xf32>
    %c0_40 = arith.constant 0 : index
    %c0_41 = arith.constant 0 : index
    %72 = vector.load %arg14[%c0_40, %c0_41] : memref<384x128xbf16, #tpu.memory_space<vmem>>, vector<384x128xbf16>
    %c0_42 = arith.constant 0 : index
    %c0_43 = arith.constant 0 : index
    %73 = vector.load %arg15[%c0_42, %c0_43] : memref<1x128xf32, #tpu.memory_space<vmem>>, vector<1x128xf32>
    %cst_44 = arith.constant 0.000000e+00 : f32
    %74 = vector.broadcast %cst_44 : f32 to vector<8x128xf32>
    %75 = tpu.concatenate %74, %69 in 0 : vector<8x128xf32>, vector<16x128xf32> -> vector<24x128xf32>
    %76 = vector.extract_strided_slice %75 {offsets = [8, 0], sizes = [16, 128], strides = [1, 1]} : vector<24x128xf32> to vector<16x128xf32>
    %77 = vector.extract_strided_slice %75 {offsets = [4, 0], sizes = [16, 128], strides = [1, 1]} : vector<24x128xf32> to vector<16x128xf32>
    %78 = vector.extract_strided_slice %75 {offsets = [0, 0], sizes = [16, 128], strides = [1, 1]} : vector<24x128xf32> to vector<16x128xf32>
    %79 = tpu.concatenate %76, %77, %78 in 1 : vector<16x128xf32>, vector<16x128xf32>, vector<16x128xf32> -> vector<16x384xf32>
    %80 = arith.truncf %79 : vector<16x384xf32> to vector<16x384xbf16>
    %cst_45 = arith.constant dense<0.000000e+00> : vector<16x128xf32>
    %81 = tpu.matmul %80, %70, %cst_45 {dimension_numbers = #tpu.dot_dimension_numbers<[1], [0], [0], [1], [0, 0, 1, 1], [], []>} : vector<16x384xbf16>, vector<384x128xbf16>, vector<16x128xf32> -> vector<16x128xf32>
    %82 = vector.broadcast %71 : vector<1x128xf32> to vector<16x128xf32>
    %83 = arith.addf %81, %82 : vector<16x128xf32>
    %cst_46 = arith.constant 0.000000e+00 : f32
    %84 = vector.broadcast %cst_46 : f32 to vector<16x128xf32>
    %85 = arith.maximumf %83, %84 : vector<16x128xf32>
    %cst_47 = arith.constant 0.000000e+00 : f32
    %86 = vector.broadcast %cst_47 : f32 to vector<8x128xf32>
    %87 = tpu.concatenate %86, %85 in 0 : vector<8x128xf32>, vector<16x128xf32> -> vector<24x128xf32>
    %88 = vector.extract_strided_slice %87 {offsets = [8, 0], sizes = [16, 128], strides = [1, 1]} : vector<24x128xf32> to vector<16x128xf32>
    %89 = vector.extract_strided_slice %87 {offsets = [4, 0], sizes = [16, 128], strides = [1, 1]} : vector<24x128xf32> to vector<16x128xf32>
    %90 = vector.extract_strided_slice %87 {offsets = [0, 0], sizes = [16, 128], strides = [1, 1]} : vector<24x128xf32> to vector<16x128xf32>
    %91 = tpu.concatenate %88, %89, %90 in 1 : vector<16x128xf32>, vector<16x128xf32>, vector<16x128xf32> -> vector<16x384xf32>
    %92 = arith.truncf %91 : vector<16x384xf32> to vector<16x384xbf16>
    %cst_48 = arith.constant dense<0.000000e+00> : vector<16x128xf32>
    %93 = tpu.matmul %92, %72, %cst_48 {dimension_numbers = #tpu.dot_dimension_numbers<[1], [0], [0], [1], [0, 0, 1, 1], [], []>} : vector<16x384xbf16>, vector<384x128xbf16>, vector<16x128xf32> -> vector<16x128xf32>
    %94 = vector.broadcast %73 : vector<1x128xf32> to vector<16x128xf32>
    %95 = arith.addf %93, %94 : vector<16x128xf32>
    %cst_49 = arith.constant 0.000000e+00 : f32
    %96 = vector.broadcast %cst_49 : f32 to vector<16x128xf32>
    %97 = arith.maximumf %95, %96 : vector<16x128xf32>
    %c0_50 = arith.constant 0 : index
    %c0_51 = arith.constant 0 : index
    %98 = vector.load %arg16[%c0_50, %c0_51] : memref<128x128xbf16, #tpu.memory_space<vmem>>, vector<128x128xbf16>
    %c0_52 = arith.constant 0 : index
    %c0_53 = arith.constant 0 : index
    %99 = vector.load %arg17[%c0_52, %c0_53] : memref<1x128xf32, #tpu.memory_space<vmem>>, vector<1x128xf32>
    %100 = arith.truncf %69 : vector<16x128xf32> to vector<16x128xbf16>
    %cst_54 = arith.constant dense<0.000000e+00> : vector<16x128xf32>
    %101 = tpu.matmul %100, %98, %cst_54 {dimension_numbers = #tpu.dot_dimension_numbers<[1], [0], [0], [1], [0, 0, 1, 1], [], []>} : vector<16x128xbf16>, vector<128x128xbf16>, vector<16x128xf32> -> vector<16x128xf32>
    %102 = vector.broadcast %99 : vector<1x128xf32> to vector<16x128xf32>
    %103 = arith.addf %101, %102 : vector<16x128xf32>
    %104 = arith.addf %97, %103 : vector<16x128xf32>
    %cst_55 = arith.constant 0.000000e+00 : f32
    %105 = vector.broadcast %cst_55 : f32 to vector<16x128xf32>
    %106 = arith.maximumf %104, %105 : vector<16x128xf32>
    %c0_56 = arith.constant 0 : index
    %c0_57 = arith.constant 0 : index
    %c0_58 = arith.constant 0 : index
    %107 = vector.load %arg18[%c0_56, %c0_57, %c0_58] : memref<1x16x128xf32, #tpu.memory_space<vmem>>, vector<1x16x128xf32>
    %108 = vector.shape_cast %107 : vector<1x16x128xf32> to vector<16x128xf32>
    %109 = vector.shape_cast %106 : vector<16x128xf32> to vector<1x16x128xf32>
    tpu.vector_store %arg18[%c0_56, %c0_57, %c0_58], %109 {strides = array<i32>} : memref<1x16x128xf32, #tpu.memory_space<vmem>>, vector<1x16x128xf32>,
    return
  }
  func.func @transform_0(%arg0: i32) -> (i32, i32, i32) {
    %c0_i32 = arith.constant 0 : i32
    %c0_i32_0 = arith.constant 0 : i32
    %c0_i32_1 = arith.constant 0 : i32
    return %arg0, %c0_i32, %c0_i32_0 : i32, i32, i32
  }
  func.func @transform_1(%arg0: i32) -> (i32, i32) {
    %c0_i32 = arith.constant 0 : i32
    %c0_i32_0 = arith.constant 0 : i32
    %c0_i32_1 = arith.constant 0 : i32
    return %c0_i32, %c0_i32_0 : i32, i32
  }
  func.func @transform_2(%arg0: i32) -> (i32, i32) {
    %c0_i32 = arith.constant 0 : i32
    %c0_i32_0 = arith.constant 0 : i32
    %c0_i32_1 = arith.constant 0 : i32
    return %c0_i32, %c0_i32_0 : i32, i32
  }
  func.func @transform_3(%arg0: i32) -> (i32, i32) {
    %c0_i32 = arith.constant 0 : i32
    %c0_i32_0 = arith.constant 0 : i32
    %c0_i32_1 = arith.constant 0 : i32
    return %c0_i32, %c0_i32_0 : i32, i32
  }
  func.func @transform_4(%arg0: i32) -> (i32, i32) {
    %c0_i32 = arith.constant 0 : i32
    %c0_i32_0 = arith.constant 0 : i32
    %c0_i32_1 = arith.constant 0 : i32
    return %c0_i32, %c0_i32_0 : i32, i32
  }
  func.func @transform_5(%arg0: i32) -> (i32, i32) {
    %c0_i32 = arith.constant 0 : i32
    %c0_i32_0 = arith.constant 0 : i32
    %c0_i32_1 = arith.constant 0 : i32
    return %c0_i32, %c0_i32_0 : i32, i32
  }
  func.func @transform_6(%arg0: i32) -> (i32, i32) {
    %c0_i32 = arith.constant 0 : i32
    %c0_i32_0 = arith.constant 0 : i32
    %c0_i32_1 = arith.constant 0 : i32
    return %c0_i32, %c0_i32_0 : i32, i32
  }
  func.func @transform_7(%arg0: i32) -> (i32, i32) {
    %c0_i32 = arith.constant 0 : i32
    %c0_i32_0 = arith.constant 0 : i32
    %c0_i32_1 = arith.constant 0 : i32
    return %c0_i32, %c0_i32_0 : i32, i32
  }
  func.func @transform_8(%arg0: i32) -> (i32, i32) {
    %c0_i32 = arith.constant 0 : i32
    %c0_i32_0 = arith.constant 0 : i32
    %c0_i32_1 = arith.constant 0 : i32
    return %c0_i32, %c0_i32_0 : i32, i32
  }
  func.func @transform_9(%arg0: i32) -> (i32, i32) {
    %c0_i32 = arith.constant 0 : i32
    %c0_i32_0 = arith.constant 0 : i32
    %c0_i32_1 = arith.constant 0 : i32
    return %c0_i32, %c0_i32_0 : i32, i32
  }
  func.func @transform_10(%arg0: i32) -> (i32, i32) {
    %c0_i32 = arith.constant 0 : i32
    %c0_i32_0 = arith.constant 0 : i32
    %c0_i32_1 = arith.constant 0 : i32
    return %c0_i32, %c0_i32_0 : i32, i32
  }
  func.func @transform_11(%arg0: i32) -> (i32, i32) {
    %c0_i32 = arith.constant 0 : i32
    %c0_i32_0 = arith.constant 0 : i32
    %c0_i32_1 = arith.constant 0 : i32
    return %c0_i32, %c0_i32_0 : i32, i32
  }
  func.func @transform_12(%arg0: i32) -> (i32, i32) {
    %c0_i32 = arith.constant 0 : i32
    %c0_i32_0 = arith.constant 0 : i32
    %c0_i32_1 = arith.constant 0 : i32
    return %c0_i32, %c0_i32_0 : i32, i32
  }
  func.func @transform_13(%arg0: i32) -> (i32, i32) {
    %c0_i32 = arith.constant 0 : i32
    %c0_i32_0 = arith.constant 0 : i32
    %c0_i32_1 = arith.constant 0 : i32
    return %c0_i32, %c0_i32_0 : i32, i32
  }
  func.func @transform_14(%arg0: i32) -> (i32, i32) {
    %c0_i32 = arith.constant 0 : i32
    %c0_i32_0 = arith.constant 0 : i32
    %c0_i32_1 = arith.constant 0 : i32
    return %c0_i32, %c0_i32_0 : i32, i32
  }
  func.func @transform_15(%arg0: i32) -> (i32, i32) {
    %c0_i32 = arith.constant 0 : i32
    %c0_i32_0 = arith.constant 0 : i32
    %c0_i32_1 = arith.constant 0 : i32
    return %c0_i32, %c0_i32_0 : i32, i32
  }
  func.func @transform_16(%arg0: i32) -> (i32, i32) {
    %c0_i32 = arith.constant 0 : i32
    %c0_i32_0 = arith.constant 0 : i32
    %c0_i32_1 = arith.constant 0 : i32
    return %c0_i32, %c0_i32_0 : i32, i32
  }
  func.func @transform_17(%arg0: i32) -> (i32, i32, i32) {
    %c0_i32 = arith.constant 0 : i32
    %c0_i32_0 = arith.constant 0 : i32
    %c0_i32_1 = arith.constant 0 : i32
    return %arg0, %c0_i32, %c0_i32_0 : i32, i32, i32
  }
}

</mosaic_0001>

<llo_original>
// kernel: tpu_custom_call.1
$region0: #{tpu_custom_call.1}
  #allocation0 [shape = 'u32[]', space=smem, size = 0x4, offset = 0x4, fixed_abs, tag = 'smem constant byte address 0x4 - core index']
  #allocation1 [shape = 'u32[72,128]{1,0:T(1,128)}', space=vmem, size = 0x9000, scoped, tag = 'internal scratch']
  %s0 = inlined_call_operand.hbm [shape: f32[2,16,128], index: 0, kind: input, shape index: {}]
  %s1 = inlined_call_operand.hbm [shape: bf16[384,128], index: 1, kind: input, shape index: {}]
  %s2 = inlined_call_operand.vmem [shape: f32[1,128], index: 2, kind: input, shape index: {}]
  %s3 = inlined_call_operand.hbm [shape: bf16[384,128], index: 3, kind: input, shape index: {}]
  %s4 = inlined_call_operand.vmem [shape: f32[1,128], index: 4, kind: input, shape index: {}]
  %s5 = inlined_call_operand.hbm [shape: bf16[128,128], index: 5, kind: input, shape index: {}]
  %s6 = inlined_call_operand.vmem [shape: f32[1,128], index: 6, kind: input, shape index: {}]
  %s7 = inlined_call_operand.hbm [shape: bf16[384,128], index: 7, kind: input, shape index: {}]
  %s8 = inlined_call_operand.vmem [shape: f32[1,128], index: 8, kind: input, shape index: {}]
  %s9 = inlined_call_operand.hbm [shape: bf16[384,128], index: 9, kind: input, shape index: {}]
  %s10 = inlined_call_operand.vmem [shape: f32[1,128], index: 10, kind: input, shape index: {}]
  %s11 = inlined_call_operand.hbm [shape: bf16[384,128], index: 11, kind: input, shape index: {}]
  %s12 = inlined_call_operand.vmem [shape: f32[1,128], index: 12, kind: input, shape index: {}]
  %s13 = inlined_call_operand.hbm [shape: bf16[384,128], index: 13, kind: input, shape index: {}]
  %s14 = inlined_call_operand.vmem [shape: f32[1,128], index: 14, kind: input, shape index: {}]
  %s15 = inlined_call_operand.hbm [shape: bf16[128,128], index: 15, kind: input, shape index: {}]
  %s16 = inlined_call_operand.vmem [shape: f32[1,128], index: 16, kind: input, shape index: {}]
  %s17 = inlined_call_operand.hbm [shape: f32[2,16,128], index: 17, kind: output, shape index: {}]
  %s18 = sld [smem:[#allocation0]]
  $region137: #{tpu_custom_call.1} parent=0
    _
  %s20 = ssub.s32 1, %s18
  %s21 = scalar_select 0, %s20, %s18
  $region1: #{tpu_custom_call.1} parent=0
    #allocation2 [shape = 'u8[16384]{0}', space=vmem, size = 0x4000, scoped, tag = 'input window, operand 0']
    #allocation3 [shape = 's32[2]{0}', space=sflag, size = 0x8, scoped, tag = 'scoped memory for tpu_custom_call.1']
    #allocation4 [shape = 's32[2]{0}', space=sflag, size = 0x8, scoped, tag = 'scoped memory for tpu_custom_call.1']
    #allocation5 [shape = 'u8[98304]{0}', space=vmem, size = 0x18000, scoped, tag = 'input window, operand 1, single buffered']
    #allocation6 [shape = 's32[1]{0}', space=sflag, size = 0x4, scoped, tag = 'scoped memory for tpu_custom_call.1']
    #allocation7 [shape = 'u8[98304]{0}', space=vmem, size = 0x18000, scoped, tag = 'input window, operand 3, single buffered']
    #allocation8 [shape = 'u8[32768]{0}', space=vmem, size = 0x8000, scoped, tag = 'input window, operand 5, single buffered']
    #allocation9 [shape = 's32[1]{0}', space=sflag, size = 0x4, scoped, tag = 'scoped memory for tpu_custom_call.1']
    #allocation10 [shape = 'u8[98304]{0}', space=vmem, size = 0x18000, scoped, tag = 'input window, operand 7, single buffered']
    #allocation11 [shape = 'u8[98304]{0}', space=vmem, size = 0x18000, scoped, tag = 'input window, operand 9, single buffered']
    #allocation12 [shape = 's32[1]{0}', space=sflag, size = 0x4, scoped, tag = 'scoped memory for tpu_custom_call.1']
    #allocation13 [shape = 'u8[98304]{0}', space=vmem, size = 0x18000, scoped, tag = 'input window, operand 11, single buffered']
    #allocation14 [shape = 'u8[98304]{0}', space=vmem, size = 0x18000, scoped, tag = 'input window, operand 13, single buffered']
    #allocation15 [shape = 's32[1]{0}', space=sflag, size = 0x4, scoped, tag = 'scoped memory for tpu_custom_call.1']
    #allocation16 [shape = 'u8[32768]{0}', space=vmem, size = 0x8000, scoped, tag = 'input window, operand 15, single buffered']
    #allocation17 [shape = 'u8[16384]{0}', space=vmem, size = 0x4000, scoped, tag = 'output window, operand 0']
    %22 = vsyncpa [#allocation3], 0
    %s23 = scalar_lea.sflag [#allocation3], 1
    %24 = vsyncpa %s23, 0
    %25 = vsyncpa [#allocation6], 0
    %26 = vsyncpa [#allocation9], 0
    %27 = vsyncpa [#allocation12], 0
    %28 = vsyncpa [#allocation15], 0
    %29 = vsyncpa [#allocation4], 0
    %s30 = scalar_lea.sflag [#allocation4], 1
    %31 = vsyncpa %s30, 0
    loop: start=0, step=1, limit=4
    $region2: #{tpu_custom_call.1} parent=1 // loop_pre_header
      _
    $region3: #{tpu_custom_call.1} parent=1 // loop_header
      %s33 = sphi 0, %s37
      %p34 = scmp.ge.s32.totalorder %s33, 4
      %s43 = sphi 0, %s45
      %s46 = sphi 0, %s43
      %s47 = sphi 0, %s46
      %s63 = sphi 0, %s47
      %s67 = sphi 0, %s67
      %s69 = sphi 0, %s67
      %s70 = sphi 0, %s69
      %s84 = sphi 0, %s70
      %s88 = sphi 0, %s88
      %s90 = sphi 0, %s88
      %s91 = sphi 0, %s90
      %s105 = sphi 0, %s91
      %s109 = sphi 0, %s109
      %s111 = sphi 0, %s109
      %s112 = sphi 0, %s111
      %s126 = sphi 0, %s112
      %s130 = sphi 0, %s130
      %s132 = sphi 0, %s130
      %s133 = sphi 0, %s132
      %s147 = sphi 0, %s133
      %s151 = sphi 0, %s151
      %s153 = sphi 0, %s151
      %s154 = sphi 0, %s153
      %s168 = sphi 0, %s154
      %s172 = sphi 0, %s172
      %s174 = sphi 0, %s172
      %s175 = sphi 0, %s174
      %s189 = sphi 0, %s175
      %s193 = sphi 0, %s193
      %s195 = sphi 0, %s193
      %s196 = sphi 0, %s195
      %s210 = sphi 0, %s196
      %s214 = sphi 0, %s214
      %s216 = sphi 0, %s214
      %s217 = sphi 0, %s216
      %s231 = sphi 0, %s217
      %s235 = sphi 0, %s235
      %s237 = sphi 0, %s235
      %s238 = sphi 0, %s237
      %s252 = sphi 0, %s238
      %s256 = sphi 0, %s256
      %s258 = sphi 0, %s256
      %s259 = sphi 0, %s258
      %s273 = sphi 0, %s259
      %s277 = sphi 0, %s277
      %s279 = sphi 0, %s277
      %s280 = sphi 0, %s279
      %s294 = sphi 0, %s280
      %s298 = sphi 0, %s298
      %s300 = sphi 0, %s298
      %s301 = sphi 0, %s300
      %s315 = sphi 0, %s301
      %s319 = sphi 0, %s319
      %s321 = sphi 0, %s319
      %s322 = sphi 0, %s321
      %s336 = sphi 0, %s322
      %s340 = sphi 0, %s340
      %s342 = sphi 0, %s340
      %s343 = sphi 0, %s342
      %s357 = sphi 0, %s343
      %s361 = sphi 0, %s361
      %s363 = sphi 0, %s361
      %s364 = sphi 0, %s363
      %s378 = sphi 0, %s364
      %s382 = sphi 0, %s382
      %s384 = sphi 0, %s382
      %s385 = sphi 0, %s384
      %s399 = sphi 0, %s385
      %s405 = sphi 0, %s407
      %s408 = sphi 0, %s405
      %s409 = sphi 0, %s408
      %s425 = sphi 0, %s409
    $region4: #{tpu_custom_call.1} parent=1 // loop_header_branch
      %36 = sbr.rel (%p34) target = $region8
    $region5: #{tpu_custom_call.1} parent=1 // loop_body
      %s38 = ssub.s32 %s33, 1
      %s39 = ssub.s32 %s33, 2
      %s40 = sadd.s32 %s33, 1
      %s41 = ssub.s32 %s33, %s40
      %p42 = scmp.eq.s32.totalorder %s41, 0
      %s44 = sadd.s32 %s43, 1
      %s45 = scalar_select %p42, %s43, %s44
      %p48 = pneg %p42
      %p49 = scmp.eq.s32.totalorder %s33, 1
      %p50 = por %p48, %p49
      %p51 = scmp.ne.s32.totalorder %s43, %s46
      %p52 = scmp.eq.s32.totalorder %s33, 0
      %p53 = por %p51, %p52
      %p54 = scmp.ne.s32.totalorder %s43, %s46
      %p55 = scmp.eq.s32.totalorder %s38, 1
      %p56 = por %p54, %p55
      %p57 = scmp.ne.s32.totalorder %s46, %s47
      %p58 = scmp.eq.s32.totalorder %s38, 0
      %p59 = por %p57, %p58
      %p60 = scmp.ne.s32.totalorder %s46, %s47
      %p61 = scmp.eq.s32.totalorder %s39, 1
      %p62 = por %p60, %p61
      %p64 = scmp.ne.s32.totalorder %s47, %s63
      %p65 = scmp.eq.s32.totalorder %s39, 0
      %p66 = por %p64, %p65
      %s68 = sadd.s32 %s67, 1
      %p71 = scmp.eq.s32.totalorder %s33, 1
      %p72 = scmp.ne.s32.totalorder %s67, %s69
      %p73 = scmp.eq.s32.totalorder %s33, 0
      %p74 = por %p72, %p73
      %p75 = scmp.ne.s32.totalorder %s67, %s69
      %p76 = scmp.eq.s32.totalorder %s38, 1
      %p77 = por %p75, %p76
      %p78 = scmp.ne.s32.totalorder %s69, %s70
      %p79 = scmp.eq.s32.totalorder %s38, 0
      %p80 = por %p78, %p79
      %p81 = scmp.ne.s32.totalorder %s69, %s70
      %p82 = scmp.eq.s32.totalorder %s39, 1
      %p83 = por %p81, %p82
      %p85 = scmp.ne.s32.totalorder %s70, %s84
      %p86 = scmp.eq.s32.totalorder %s39, 0
      %p87 = por %p85, %p86
      %s89 = sadd.s32 %s88, 1
      %p92 = scmp.eq.s32.totalorder %s33, 1
      %p93 = scmp.ne.s32.totalorder %s88, %s90
      %p94 = scmp.eq.s32.totalorder %s33, 0
      %p95 = por %p93, %p94
      %p96 = scmp.ne.s32.totalorder %s88, %s90
      %p97 = scmp.eq.s32.totalorder %s38, 1
      %p98 = por %p96, %p97
      %p99 = scmp.ne.s32.totalorder %s90, %s91
      %p100 = scmp.eq.s32.totalorder %s38, 0
      %p101 = por %p99, %p100
      %p102 = scmp.ne.s32.totalorder %s90, %s91
      %p103 = scmp.eq.s32.totalorder %s39, 1
      %p104 = por %p102, %p103
      %p106 = scmp.ne.s32.totalorder %s91, %s105
      %p107 = scmp.eq.s32.totalorder %s39, 0
      %p108 = por %p106, %p107
      %s110 = sadd.s32 %s109, 1
      %p113 = scmp.eq.s32.totalorder %s33, 1
      %p114 = scmp.ne.s32.totalorder %s109, %s111
      %p115 = scmp.eq.s32.totalorder %s33, 0
      %p116 = por %p114, %p115
      %p117 = scmp.ne.s32.totalorder %s109, %s111
      %p118 = scmp.eq.s32.totalorder %s38, 1
      %p119 = por %p117, %p118
      %p120 = scmp.ne.s32.totalorder %s111, %s112
      %p121 = scmp.eq.s32.totalorder %s38, 0
      %p122 = por %p120, %p121
      %p123 = scmp.ne.s32.totalorder %s111, %s112
      %p124 = scmp.eq.s32.totalorder %s39, 1
      %p125 = por %p123, %p124
      %p127 = scmp.ne.s32.totalorder %s112, %s126
      %p128 = scmp.eq.s32.totalorder %s39, 0
      %p129 = por %p127, %p128
      %s131 = sadd.s32 %s130, 1
      %p134 = scmp.eq.s32.totalorder %s33, 1
      %p135 = scmp.ne.s32.totalorder %s130, %s132
      %p136 = scmp.eq.s32.totalorder %s33, 0
      %p137 = por %p135, %p136
      %p138 = scmp.ne.s32.totalorder %s130, %s132
      %p139 = scmp.eq.s32.totalorder %s38, 1
      %p140 = por %p138, %p139
      %p141 = scmp.ne.s32.totalorder %s132, %s133
      %p142 = scmp.eq.s32.totalorder %s38, 0
      %p143 = por %p141, %p142
      %p144 = scmp.ne.s32.totalorder %s132, %s133
      %p145 = scmp.eq.s32.totalorder %s39, 1
      %p146 = por %p144, %p145
      %p148 = scmp.ne.s32.totalorder %s133, %s147
      %p149 = scmp.eq.s32.totalorder %s39, 0
      %p150 = por %p148, %p149
      %s152 = sadd.s32 %s151, 1
      %p155 = scmp.eq.s32.totalorder %s33, 1
      %p156 = scmp.ne.s32.totalorder %s151, %s153
      %p157 = scmp.eq.s32.totalorder %s33, 0
      %p158 = por %p156, %p157
      %p159 = scmp.ne.s32.totalorder %s151, %s153
      %p160 = scmp.eq.s32.totalorder %s38, 1
      %p161 = por %p159, %p160
      %p162 = scmp.ne.s32.totalorder %s153, %s154
      %p163 = scmp.eq.s32.totalorder %s38, 0
      %p164 = por %p162, %p163
      %p165 = scmp.ne.s32.totalorder %s153, %s154
      %p166 = scmp.eq.s32.totalorder %s39, 1
      %p167 = por %p165, %p166
      %p169 = scmp.ne.s32.totalorder %s154, %s168
      %p170 = scmp.eq.s32.totalorder %s39, 0
      %p171 = por %p169, %p170
      %s173 = sadd.s32 %s172, 1
      %p176 = scmp.eq.s32.totalorder %s33, 1
      %p177 = scmp.ne.s32.totalorder %s172, %s174
      %p178 = scmp.eq.s32.totalorder %s33, 0
      %p179 = por %p177, %p178
      %p180 = scmp.ne.s32.totalorder %s172, %s174
      %p181 = scmp.eq.s32.totalorder %s38, 1
      %p182 = por %p180, %p181
      %p183 = scmp.ne.s32.totalorder %s174, %s175
      %p184 = scmp.eq.s32.totalorder %s38, 0
      %p185 = por %p183, %p184
      %p186 = scmp.ne.s32.totalorder %s174, %s175
      %p187 = scmp.eq.s32.totalorder %s39, 1
      %p188 = por %p186, %p187
      %p190 = scmp.ne.s32.totalorder %s175, %s189
      %p191 = scmp.eq.s32.totalorder %s39, 0
      %p192 = por %p190, %p191
      %s194 = sadd.s32 %s193, 1
      %p197 = scmp.eq.s32.totalorder %s33, 1
      %p198 = scmp.ne.s32.totalorder %s193, %s195
      %p199 = scmp.eq.s32.totalorder %s33, 0
      %p200 = por %p198, %p199
      %p201 = scmp.ne.s32.totalorder %s193, %s195
      %p202 = scmp.eq.s32.totalorder %s38, 1
      %p203 = por %p201, %p202
      %p204 = scmp.ne.s32.totalorder %s195, %s196
      %p205 = scmp.eq.s32.totalorder %s38, 0
      %p206 = por %p204, %p205
      %p207 = scmp.ne.s32.totalorder %s195, %s196
      %p208 = scmp.eq.s32.totalorder %s39, 1
      %p209 = por %p207, %p208
      %p211 = scmp.ne.s32.totalorder %s196, %s210
      %p212 = scmp.eq.s32.totalorder %s39, 0
      %p213 = por %p211, %p212
      %s215 = sadd.s32 %s214, 1
      %p218 = scmp.eq.s32.totalorder %s33, 1
      %p219 = scmp.ne.s32.totalorder %s214, %s216
      %p220 = scmp.eq.s32.totalorder %s33, 0
      %p221 = por %p219, %p220
      %p222 = scmp.ne.s32.totalorder %s214, %s216
      %p223 = scmp.eq.s32.totalorder %s38, 1
      %p224 = por %p222, %p223
      %p225 = scmp.ne.s32.totalorder %s216, %s217
      %p226 = scmp.eq.s32.totalorder %s38, 0
      %p227 = por %p225, %p226
      %p228 = scmp.ne.s32.totalorder %s216, %s217
      %p229 = scmp.eq.s32.totalorder %s39, 1
      %p230 = por %p228, %p229
      %p232 = scmp.ne.s32.totalorder %s217, %s231
      %p233 = scmp.eq.s32.totalorder %s39, 0
      %p234 = por %p232, %p233
      %s236 = sadd.s32 %s235, 1
      %p239 = scmp.eq.s32.totalorder %s33, 1
      %p240 = scmp.ne.s32.totalorder %s235, %s237
      %p241 = scmp.eq.s32.totalorder %s33, 0
      %p242 = por %p240, %p241
      %p243 = scmp.ne.s32.totalorder %s235, %s237
      %p244 = scmp.eq.s32.totalorder %s38, 1
      %p245 = por %p243, %p244
      %p246 = scmp.ne.s32.totalorder %s237, %s238
      %p247 = scmp.eq.s32.totalorder %s38, 0
      %p248 = por %p246, %p247
      %p249 = scmp.ne.s32.totalorder %s237, %s238
      %p250 = scmp.eq.s32.totalorder %s39, 1
      %p251 = por %p249, %p250
      %p253 = scmp.ne.s32.totalorder %s238, %s252
      %p254 = scmp.eq.s32.totalorder %s39, 0
      %p255 = por %p253, %p254
      %s257 = sadd.s32 %s256, 1
      %p260 = scmp.eq.s32.totalorder %s33, 1
      %p261 = scmp.ne.s32.totalorder %s256, %s258
      %p262 = scmp.eq.s32.totalorder %s33, 0
      %p263 = por %p261, %p262
      %p264 = scmp.ne.s32.totalorder %s256, %s258
      %p265 = scmp.eq.s32.totalorder %s38, 1
      %p266 = por %p264, %p265
      %p267 = scmp.ne.s32.totalorder %s258, %s259
      %p268 = scmp.eq.s32.totalorder %s38, 0
      %p269 = por %p267, %p268
      %p270 = scmp.ne.s32.totalorder %s258, %s259
      %p271 = scmp.eq.s32.totalorder %s39, 1
      %p272 = por %p270, %p271
      %p274 = scmp.ne.s32.totalorder %s259, %s273
      %p275 = scmp.eq.s32.totalorder %s39, 0
      %p276 = por %p274, %p275
      %s278 = sadd.s32 %s277, 1
      %p281 = scmp.eq.s32.totalorder %s33, 1
      %p282 = scmp.ne.s32.totalorder %s277, %s279
      %p283 = scmp.eq.s32.totalorder %s33, 0
      %p284 = por %p282, %p283
      %p285 = scmp.ne.s32.totalorder %s277, %s279
      %p286 = scmp.eq.s32.totalorder %s38, 1
      %p287 = por %p285, %p286
      %p288 = scmp.ne.s32.totalorder %s279, %s280
      %p289 = scmp.eq.s32.totalorder %s38, 0
      %p290 = por %p288, %p289
      %p291 = scmp.ne.s32.totalorder %s279, %s280
      %p292 = scmp.eq.s32.totalorder %s39, 1
      %p293 = por %p291, %p292
      %p295 = scmp.ne.s32.totalorder %s280, %s294
      %p296 = scmp.eq.s32.totalorder %s39, 0
      %p297 = por %p295, %p296
      %s299 = sadd.s32 %s298, 1
      %p302 = scmp.eq.s32.totalorder %s33, 1
      %p303 = scmp.ne.s32.totalorder %s298, %s300
      %p304 = scmp.eq.s32.totalorder %s33, 0
      %p305 = por %p303, %p304
      %p306 = scmp.ne.s32.totalorder %s298, %s300
      %p307 = scmp.eq.s32.totalorder %s38, 1
      %p308 = por %p306, %p307
      %p309 = scmp.ne.s32.totalorder %s300, %s301
      %p310 = scmp.eq.s32.totalorder %s38, 0
      %p311 = por %p309, %p310
      %p312 = scmp.ne.s32.totalorder %s300, %s301
      %p313 = scmp.eq.s32.totalorder %s39, 1
      %p314 = por %p312, %p313
      %p316 = scmp.ne.s32.totalorder %s301, %s315
      %p317 = scmp.eq.s32.totalorder %s39, 0
      %p318 = por %p316, %p317
      %s320 = sadd.s32 %s319, 1
      %p323 = scmp.eq.s32.totalorder %s33, 1
      %p324 = scmp.ne.s32.totalorder %s319, %s321
      %p325 = scmp.eq.s32.totalorder %s33, 0
      %p326 = por %p324, %p325
      %p327 = scmp.ne.s32.totalorder %s319, %s321
      %p328 = scmp.eq.s32.totalorder %s38, 1
      %p329 = por %p327, %p328
      %p330 = scmp.ne.s32.totalorder %s321, %s322
      %p331 = scmp.eq.s32.totalorder %s38, 0
      %p332 = por %p330, %p331
      %p333 = scmp.ne.s32.totalorder %s321, %s322
      %p334 = scmp.eq.s32.totalorder %s39, 1
      %p335 = por %p333, %p334
      %p337 = scmp.ne.s32.totalorder %s322, %s336
      %p338 = scmp.eq.s32.totalorder %s39, 0
      %p339 = por %p337, %p338
      %s341 = sadd.s32 %s340, 1
      %p344 = scmp.eq.s32.totalorder %s33, 1
      %p345 = scmp.ne.s32.totalorder %s340, %s342
      %p346 = scmp.eq.s32.totalorder %s33, 0
      %p347 = por %p345, %p346
      %p348 = scmp.ne.s32.totalorder %s340, %s342
      %p349 = scmp.eq.s32.totalorder %s38, 1
      %p350 = por %p348, %p349
      %p351 = scmp.ne.s32.totalorder %s342, %s343
      %p352 = scmp.eq.s32.totalorder %s38, 0
      %p353 = por %p351, %p352
      %p354 = scmp.ne.s32.totalorder %s342, %s343
      %p355 = scmp.eq.s32.totalorder %s39, 1
      %p356 = por %p354, %p355
      %p358 = scmp.ne.s32.totalorder %s343, %s357
      %p359 = scmp.eq.s32.totalorder %s39, 0
      %p360 = por %p358, %p359
      %s362 = sadd.s32 %s361, 1
      %p365 = scmp.eq.s32.totalorder %s33, 1
      %p366 = scmp.ne.s32.totalorder %s361, %s363
      %p367 = scmp.eq.s32.totalorder %s33, 0
      %p368 = por %p366, %p367
      %p369 = scmp.ne.s32.totalorder %s361, %s363
      %p370 = scmp.eq.s32.totalorder %s38, 1
      %p371 = por %p369, %p370
      %p372 = scmp.ne.s32.totalorder %s363, %s364
      %p373 = scmp.eq.s32.totalorder %s38, 0
      %p374 = por %p372, %p373
      %p375 = scmp.ne.s32.totalorder %s363, %s364
      %p376 = scmp.eq.s32.totalorder %s39, 1
      %p377 = por %p375, %p376
      %p379 = scmp.ne.s32.totalorder %s364, %s378
      %p380 = scmp.eq.s32.totalorder %s39, 0
      %p381 = por %p379, %p380
      %s383 = sadd.s32 %s382, 1
      %p386 = scmp.eq.s32.totalorder %s33, 1
      %p387 = scmp.ne.s32.totalorder %s382, %s384
      %p388 = scmp.eq.s32.totalorder %s33, 0
      %p389 = por %p387, %p388
      %p390 = scmp.ne.s32.totalorder %s382, %s384
      %p391 = scmp.eq.s32.totalorder %s38, 1
      %p392 = por %p390, %p391
      %p393 = scmp.ne.s32.totalorder %s384, %s385
      %p394 = scmp.eq.s32.totalorder %s38, 0
      %p395 = por %p393, %p394
      %p396 = scmp.ne.s32.totalorder %s384, %s385
      %p397 = scmp.eq.s32.totalorder %s39, 1
      %p398 = por %p396, %p397
      %p400 = scmp.ne.s32.totalorder %s385, %s399
      %p401 = scmp.eq.s32.totalorder %s39, 0
      %p402 = por %p400, %p401
      %s403 = ssub.s32 %s33, %s40
      %p404 = scmp.eq.s32.totalorder %s403, 0
      %s406 = sadd.s32 %s405, 1
      %s407 = scalar_select %p404, %s405, %s406
      %p410 = pneg %p404
      %p411 = scmp.eq.s32.totalorder %s33, 1
      %p412 = por %p410, %p411
      %p413 = scmp.ne.s32.totalorder %s405, %s408
      %p414 = scmp.eq.s32.totalorder %s33, 0
      %p415 = por %p413, %p414
      %p416 = scmp.ne.s32.totalorder %s405, %s408
      %p417 = scmp.eq.s32.totalorder %s38, 1
      %p418 = por %p416, %p417
      %p419 = scmp.ne.s32.totalorder %s408, %s409
      %p420 = scmp.eq.s32.totalorder %s38, 0
      %p421 = por %p419, %p420
      %p422 = scmp.ne.s32.totalorder %s408, %s409
      %p423 = scmp.eq.s32.totalorder %s39, 1
      %p424 = por %p422, %p423
      %p426 = scmp.ne.s32.totalorder %s409, %s425
      %p427 = scmp.eq.s32.totalorder %s39, 0
      %p428 = por %p426, %p427
      %p429 = scmp.le.s32.totalorder 1, %s33
      %p430 = scmp.lt.s32.totalorder %s33, 3
      %p431 = pnand %p429, %p430
      %p432 = pneg %p431
      // Predicated region
      $region9: #{tpu_custom_call.1} parent=5 // pred_check
        _
      $region10: #{tpu_custom_call.1} parent=5 // pred_check_branch
        %434 = sbr.rel (%p431) target = $region12
      $region11: #{tpu_custom_call.1} parent=5 // pred_region
        %s435 = ssub.s32 %s33, 1
        // Predicated region
        $region13: #{tpu_custom_call.1} parent=11 // pred_check
          %p436 = pneg %p80
        $region14: #{tpu_custom_call.1} parent=11 // pred_check_branch
          %438 = sbr.rel (%p436) target = $region16
        $region15: #{tpu_custom_call.1} parent=11 // pred_region
          %440 = vsyncadd [#allocation6], 0
          %s441 = sshll.u32 %s1, 4
          %s442 = int_to_ptr.hbm [resolvable:$true] %s441
          %s443 = sshll.u32 [#allocation5], 4
          %s444 = int_to_ptr.vmem [resolvable:$true] %s443
          %449 = dma.hbm_to_vmem [thread:$0]  %s442, 3072, %s444, [#allocation6], 64, 64, 4
        $region16: #{tpu_custom_call.1} parent=11 // pred_fallthru
          _
        // Predicated region
        $region17: #{tpu_custom_call.1} parent=11 // pred_check
          %p450 = pneg %p101
        $region18: #{tpu_custom_call.1} parent=11 // pred_check_branch
          %452 = sbr.rel (%p450) target = $region20
        $region19: #{tpu_custom_call.1} parent=11 // pred_region
          _
        $region20: #{tpu_custom_call.1} parent=11 // pred_fallthru
          _
        // Predicated region
        $region21: #{tpu_custom_call.1} parent=11 // pred_check
          %p453 = pneg %p122
        $region22: #{tpu_custom_call.1} parent=11 // pred_check_branch
          %455 = sbr.rel (%p453) target = $region24
        $region23: #{tpu_custom_call.1} parent=11 // pred_region
          %457 = vsyncadd [#allocation6], 0
          %s458 = sshll.u32 %s3, 4
          %s459 = int_to_ptr.hbm [resolvable:$true] %s458
          %s460 = sshll.u32 [#allocation7], 4
          %s461 = int_to_ptr.vmem [resolvable:$true] %s460
          %466 = dma.hbm_to_vmem [thread:$0]  %s459, 3072, %s461, [#allocation6], 64, 64, 4
        $region24: #{tpu_custom_call.1} parent=11 // pred_fallthru
          _
        // Predicated region
        $region25: #{tpu_custom_call.1} parent=11 // pred_check
          %p467 = pneg %p143
        $region26: #{tpu_custom_call.1} parent=11 // pred_check_branch
          %469 = sbr.rel (%p467) target = $region28
        $region27: #{tpu_custom_call.1} parent=11 // pred_region
          _
        $region28: #{tpu_custom_call.1} parent=11 // pred_fallthru
          _
        // Predicated region
        $region29: #{tpu_custom_call.1} parent=11 // pred_check
          %p470 = pneg %p164
        $region30: #{tpu_custom_call.1} parent=11 // pred_check_branch
          %472 = sbr.rel (%p470) target = $region32
        $region31: #{tpu_custom_call.1} parent=11 // pred_region
          %474 = vsyncadd [#allocation9], 0
          %s475 = sshll.u32 %s5, 4
          %s476 = int_to_ptr.hbm [resolvable:$true] %s475
          %s477 = sshll.u32 [#allocation8], 4
          %s478 = int_to_ptr.vmem [resolvable:$true] %s477
          %483 = dma.hbm_to_vmem [thread:$0]  %s476, 1024, %s478, [#allocation9], 64, 64, 4
        $region32: #{tpu_custom_call.1} parent=11 // pred_fallthru
          _
        // Predicated region
        $region33: #{tpu_custom_call.1} parent=11 // pred_check
          %p484 = pneg %p185
        $region34: #{tpu_custom_call.1} parent=11 // pred_check_branch
          %486 = sbr.rel (%p484) target = $region36
        $region35: #{tpu_custom_call.1} parent=11 // pred_region
          _
        $region36: #{tpu_custom_call.1} parent=11 // pred_fallthru
          _
        // Predicated region
        $region37: #{tpu_custom_call.1} parent=11 // pred_check
          %p487 = pneg %p206
        $region38: #{tpu_custom_call.1} parent=11 // pred_check_branch
          %489 = sbr.rel (%p487) target = $region40
        $region39: #{tpu_custom_call.1} parent=11 // pred_region
          %491 = vsyncadd [#allocation9], 0
          %s492 = sshll.u32 %s7, 4
          %s493 = int_to_ptr.hbm [resolvable:$true] %s492
          %s494 = sshll.u32 [#allocation10], 4
          %s495 = int_to_ptr.vmem [resolvable:$true] %s494
          %500 = dma.hbm_to_vmem [thread:$0]  %s493, 3072, %s495, [#allocation9], 64, 64, 4
        $region40: #{tpu_custom_call.1} parent=11 // pred_fallthru
          _
        // Predicated region
        $region41: #{tpu_custom_call.1} parent=11 // pred_check
          %p501 = pneg %p227
        $region42: #{tpu_custom_call.1} parent=11 // pred_check_branch
          %503 = sbr.rel (%p501) target = $region44
        $region43: #{tpu_custom_call.1} parent=11 // pred_region
          _
        $region44: #{tpu_custom_call.1} parent=11 // pred_fallthru
          _
        // Predicated region
        $region45: #{tpu_custom_call.1} parent=11 // pred_check
          %p504 = pneg %p248
        $region46: #{tpu_custom_call.1} parent=11 // pred_check_branch
          %506 = sbr.rel (%p504) target = $region48
        $region47: #{tpu_custom_call.1} parent=11 // pred_region
          %508 = vsyncadd [#allocation12], 0
          %s509 = sshll.u32 %s9, 4
          %s510 = int_to_ptr.hbm [resolvable:$true] %s509
          %s511 = sshll.u32 [#allocation11], 4
          %s512 = int_to_ptr.vmem [resolvable:$true] %s511
          %517 = dma.hbm_to_vmem [thread:$0]  %s510, 3072, %s512, [#allocation12], 64, 64, 4
        $region48: #{tpu_custom_call.1} parent=11 // pred_fallthru
          _
        // Predicated region
        $region49: #{tpu_custom_call.1} parent=11 // pred_check
          %p518 = pneg %p269
        $region50: #{tpu_custom_call.1} parent=11 // pred_check_branch
          %520 = sbr.rel (%p518) target = $region52
        $region51: #{tpu_custom_call.1} parent=11 // pred_region
          _
        $region52: #{tpu_custom_call.1} parent=11 // pred_fallthru
          _
        // Predicated region
        $region53: #{tpu_custom_call.1} parent=11 // pred_check
          %p521 = pneg %p290
        $region54: #{tpu_custom_call.1} parent=11 // pred_check_branch
          %523 = sbr.rel (%p521) target = $region56
        $region55: #{tpu_custom_call.1} parent=11 // pred_region
          %525 = vsyncadd [#allocation12], 0
          %s526 = sshll.u32 %s11, 4
          %s527 = int_to_ptr.hbm [resolvable:$true] %s526
          %s528 = sshll.u32 [#allocation13], 4
          %s529 = int_to_ptr.vmem [resolvable:$true] %s528
          %534 = dma.hbm_to_vmem [thread:$0]  %s527, 3072, %s529, [#allocation12], 64, 64, 4
        $region56: #{tpu_custom_call.1} parent=11 // pred_fallthru
          _
        // Predicated region
        $region57: #{tpu_custom_call.1} parent=11 // pred_check
          %p535 = pneg %p311
        $region58: #{tpu_custom_call.1} parent=11 // pred_check_branch
          %537 = sbr.rel (%p535) target = $region60
        $region59: #{tpu_custom_call.1} parent=11 // pred_region
          _
        $region60: #{tpu_custom_call.1} parent=11 // pred_fallthru
          _
        // Predicated region
        $region61: #{tpu_custom_call.1} parent=11 // pred_check
          %p538 = pneg %p332
        $region62: #{tpu_custom_call.1} parent=11 // pred_check_branch
          %540 = sbr.rel (%p538) target = $region64
        $region63: #{tpu_custom_call.1} parent=11 // pred_region
          %542 = vsyncadd [#allocation15], 0
          %s543 = sshll.u32 %s13, 4
          %s544 = int_to_ptr.hbm [resolvable:$true] %s543
          %s545 = sshll.u32 [#allocation14], 4
          %s546 = int_to_ptr.vmem [resolvable:$true] %s545
          %551 = dma.hbm_to_vmem [thread:$0]  %s544, 3072, %s546, [#allocation15], 64, 64, 4
        $region64: #{tpu_custom_call.1} parent=11 // pred_fallthru
          _
        // Predicated region
        $region65: #{tpu_custom_call.1} parent=11 // pred_check
          %p552 = pneg %p353
        $region66: #{tpu_custom_call.1} parent=11 // pred_check_branch
          %554 = sbr.rel (%p552) target = $region68
        $region67: #{tpu_custom_call.1} parent=11 // pred_region
          _
        $region68: #{tpu_custom_call.1} parent=11 // pred_fallthru
          _
        // Predicated region
        $region69: #{tpu_custom_call.1} parent=11 // pred_check
          %p555 = pneg %p374
        $region70: #{tpu_custom_call.1} parent=11 // pred_check_branch
          %557 = sbr.rel (%p555) target = $region72
        $region71: #{tpu_custom_call.1} parent=11 // pred_region
          %559 = vsyncadd [#allocation15], 0
          %s560 = sshll.u32 %s15, 4
          %s561 = int_to_ptr.hbm [resolvable:$true] %s560
          %s562 = sshll.u32 [#allocation16], 4
          %s563 = int_to_ptr.vmem [resolvable:$true] %s562
          %568 = dma.hbm_to_vmem [thread:$0]  %s561, 1024, %s563, [#allocation15], 64, 64, 4
        $region72: #{tpu_custom_call.1} parent=11 // pred_fallthru
          _
        // Predicated region
        $region73: #{tpu_custom_call.1} parent=11 // pred_check
          %p569 = pneg %p395
        $region74: #{tpu_custom_call.1} parent=11 // pred_check_branch
          %571 = sbr.rel (%p569) target = $region76
        $region75: #{tpu_custom_call.1} parent=11 // pred_region
          _
        $region76: #{tpu_custom_call.1} parent=11 // pred_fallthru
          _
      $region12: #{tpu_custom_call.1} parent=5 // pred_fallthru
        _
      %p572 = scmp.lt.s32.totalorder %s33, 2
      // Predicated region
      $region77: #{tpu_custom_call.1} parent=5 // pred_check
        %p573 = pneg %p572
      $region78: #{tpu_custom_call.1} parent=5 // pred_check_branch
        %575 = sbr.rel (%p573) target = $region80
      $region79: #{tpu_custom_call.1} parent=5 // pred_region
        // Predicated region
        $region81: #{tpu_custom_call.1} parent=79 // pred_check
          %p576 = pneg %p53
        $region82: #{tpu_custom_call.1} parent=79 // pred_check_branch
          %578 = sbr.rel (%p576) target = $region84
        $region83: #{tpu_custom_call.1} parent=79 // pred_region
          %s579 = sand.u32 %s43, 1
          %s580 = scalar_lea.sflag [#allocation3], %s579
          %s581 = sand.u32 %s43, 1
          %s582 = smul.addr %s581, 16
          %s583 = scalar_lea.vmem [#allocation2], %s582
          %585 = vsyncadd %s580, 0
          %s586 = smul.addr %s33, 2
          %s587 = smul.addr %s586, 8
          %s588 = scalar_lea.hbm %s0, %s587
          %s589 = sshll.u32 %s588, 4
          %s590 = int_to_ptr.hbm [resolvable:$true] %s589
          %s591 = sshll.u32 %s583, 4
          %s592 = int_to_ptr.vmem [resolvable:$true] %s591
          %597 = dma.hbm_to_vmem [thread:$0]  %s590, 256, %s592, %s580, 128, 128, 8
        $region84: #{tpu_custom_call.1} parent=79 // pred_fallthru
          _
      $region80: #{tpu_custom_call.1} parent=5 // pred_fallthru
        _
      %p598 = scmp.le.s32.totalorder 1, %s33
      %p599 = scmp.lt.s32.totalorder %s33, 3
      %p600 = pnand %p598, %p599
      %p601 = pneg %p600
      // Predicated region
      $region85: #{tpu_custom_call.1} parent=5 // pred_check
        _
      $region86: #{tpu_custom_call.1} parent=5 // pred_check_branch
        %603 = sbr.rel (%p600) target = $region88
      $region87: #{tpu_custom_call.1} parent=5 // pred_region
        %s604 = ssub.s32 %s33, 1
        %s605 = sand.u32 %s46, 1
        %s606 = scalar_lea.sflag [#allocation3], %s605
        %s607 = sand.u32 %s46, 1
        %s608 = smul.addr %s607, 16
        %s609 = scalar_lea.vmem [#allocation2], %s608
        // Predicated region
        $region89: #{tpu_custom_call.1} parent=87 // pred_check
          %p610 = pneg %p59
        $region90: #{tpu_custom_call.1} parent=87 // pred_check_branch
          %612 = sbr.rel (%p610) target = $region92
        $region91: #{tpu_custom_call.1} parent=87 // pred_region
          %614 = dma.done %s606, 256
        $region92: #{tpu_custom_call.1} parent=87 // pred_fallthru
          _
        // Predicated region
        $region93: #{tpu_custom_call.1} parent=87 // pred_check
          %p615 = pneg %p80
        $region94: #{tpu_custom_call.1} parent=87 // pred_check_branch
          %617 = sbr.rel (%p615) target = $region96
        $region95: #{tpu_custom_call.1} parent=87 // pred_region
          %619 = dma.done [#allocation6], 3072
        $region96: #{tpu_custom_call.1} parent=87 // pred_fallthru
          _
        // Predicated region
        $region97: #{tpu_custom_call.1} parent=87 // pred_check
          %p620 = pneg %p122
        $region98: #{tpu_custom_call.1} parent=87 // pred_check_branch
          %622 = sbr.rel (%p620) target = $region100
        $region99: #{tpu_custom_call.1} parent=87 // pred_region
          %624 = dma.done [#allocation6], 3072
        $region100: #{tpu_custom_call.1} parent=87 // pred_fallthru
          _
        // Predicated region
        $region101: #{tpu_custom_call.1} parent=87 // pred_check
          %p625 = pneg %p164
        $region102: #{tpu_custom_call.1} parent=87 // pred_check_branch
          %627 = sbr.rel (%p625) target = $region104
        $region103: #{tpu_custom_call.1} parent=87 // pred_region
          %629 = dma.done [#allocation9], 1024
        $region104: #{tpu_custom_call.1} parent=87 // pred_fallthru
          _
        // Predicated region
        $region105: #{tpu_custom_call.1} parent=87 // pred_check
          %p630 = pneg %p206
        $region106: #{tpu_custom_call.1} parent=87 // pred_check_branch
          %632 = sbr.rel (%p630) target = $region108
        $region107: #{tpu_custom_call.1} parent=87 // pred_region
          %634 = dma.done [#allocation9], 3072
        $region108: #{tpu_custom_call.1} parent=87 // pred_fallthru
          _
        // Predicated region
        $region109: #{tpu_custom_call.1} parent=87 // pred_check
          %p635 = pneg %p248
        $region110: #{tpu_custom_call.1} parent=87 // pred_check_branch
          %637 = sbr.rel (%p635) target = $region112
        $region111: #{tpu_custom_call.1} parent=87 // pred_region
          %639 = dma.done [#allocation12], 3072
        $region112: #{tpu_custom_call.1} parent=87 // pred_fallthru
          _
        // Predicated region
        $region113: #{tpu_custom_call.1} parent=87 // pred_check
          %p640 = pneg %p290
        $region114: #{tpu_custom_call.1} parent=87 // pred_check_branch
          %642 = sbr.rel (%p640) target = $region116
        $region115: #{tpu_custom_call.1} parent=87 // pred_region
          %644 = dma.done [#allocation12], 3072
        $region116: #{tpu_custom_call.1} parent=87 // pred_fallthru
          _
        // Predicated region
        $region117: #{tpu_custom_call.1} parent=87 // pred_check
          %p645 = pneg %p332
        $region118: #{tpu_custom_call.1} parent=87 // pred_check_branch
          %647 = sbr.rel (%p645) target = $region120
        $region119: #{tpu_custom_call.1} parent=87 // pred_region
          %649 = dma.done [#allocation15], 3072
        $region120: #{tpu_custom_call.1} parent=87 // pred_fallthru
          _
        // Predicated region
        $region121: #{tpu_custom_call.1} parent=87 // pred_check
          %p650 = pneg %p374
        $region122: #{tpu_custom_call.1} parent=87 // pred_check_branch
          %652 = sbr.rel (%p650) target = $region124
        $region123: #{tpu_custom_call.1} parent=87 // pred_region
          %654 = dma.done [#allocation15], 1024
        $region124: #{tpu_custom_call.1} parent=87 // pred_fallthru
          _
        %s655 = sand.u32 %s46, 1
        %s656 = scalar_lea.sflag [#allocation3], %s655
        %s657 = sand.u32 %s46, 1
        %s658 = smul.addr %s657, 16
        %s659 = scalar_lea.vmem [#allocation2], %s658
        %p660 = pneg %p59
        %p661 = pneg %p56
        %p662 = pneg %p80
        %p663 = pneg %p77
        %p664 = pneg %p101
        %p665 = pneg %p98
        %p666 = pneg %p122
        %p667 = pneg %p119
        %p668 = pneg %p143
        %p669 = pneg %p140
        %p670 = pneg %p164
        %p671 = pneg %p161
        %p672 = pneg %p185
        %p673 = pneg %p182
        %p674 = pneg %p206
        %p675 = pneg %p203
        %p676 = pneg %p227
        %p677 = pneg %p224
        %p678 = pneg %p248
        %p679 = pneg %p245
        %p680 = pneg %p269
        %p681 = pneg %p266
        %p682 = pneg %p290
        %p683 = pneg %p287
        %p684 = pneg %p311
        %p685 = pneg %p308
        %p686 = pneg %p332
        %p687 = pneg %p329
        %p688 = pneg %p353
        %p689 = pneg %p350
        %p690 = pneg %p374
        %p691 = pneg %p371
        %p692 = pneg %p395
        %p693 = pneg %p392
        %p694 = pneg %p421
        %p695 = pneg %p418
        %s696 = sand.u32 %s408, 1
        %s697 = scalar_lea.sflag [#allocation4], %s696
        %s698 = sand.u32 %s408, 1
        %s699 = smul.addr %s698, 16
        %s700 = scalar_lea.vmem [#allocation17], %s699
        %v701 = vld [vmem:[%s609] sm:$0xff]
        %v702 = vld [vmem:[%s609 + $0x8] sm:$0xff]
        %v703 = vld [vmem:[#allocation5] sm:$0xf]
        %v704 = vld [vmem:[#allocation5 + $0x4] sm:$0xf]
        %v705 = vld [vmem:[#allocation5 + $0x8] sm:$0xf]
        %v706 = vld [vmem:[#allocation5 + $0xc] sm:$0xf]
        %v707 = vld [vmem:[#allocation5 + $0x10] sm:$0xf]
        %v708 = vld [vmem:[#allocation5 + $0x14] sm:$0xf]
        %v709 = vld [vmem:[#allocation5 + $0x18] sm:$0xf]
        %v710 = vld [vmem:[#allocation5 + $0x1c] sm:$0xf]
        %v711 = vld [vmem:[#allocation5 + $0x20] sm:$0xf]
        %v712 = vld [vmem:[#allocation5 + $0x24] sm:$0xf]
        %v713 = vld [vmem:[#allocation5 + $0x28] sm:$0xf]
        %v714 = vld [vmem:[#allocation5 + $0x2c] sm:$0xf]
        %v715 = vld [vmem:[#allocation5 + $0x30] sm:$0xf]
        %v716 = vld [vmem:[#allocation5 + $0x34] sm:$0xf]
        %v717 = vld [vmem:[#allocation5 + $0x38] sm:$0xf]
        %v718 = vld [vmem:[#allocation5 + $0x3c] sm:$0xf]
        %v719 = vld [vmem:[#allocation5 + $0x40] sm:$0xf]
        %v720 = vld [vmem:[#allocation5 + $0x44] sm:$0xf]
        %v721 = vld [vmem:[#allocation5 + $0x48] sm:$0xf]
        %v722 = vld [vmem:[#allocation5 + $0x4c] sm:$0xf]
        %v723 = vld [vmem:[#allocation5 + $0x50] sm:$0xf]
        %v724 = vld [vmem:[#allocation5 + $0x54] sm:$0xf]
        %v725 = vld [vmem:[#allocation5 + $0x58] sm:$0xf]
        %v726 = vld [vmem:[#allocation5 + $0x5c] sm:$0xf]
        %v727 = vld [vmem:[#allocation5 + $0x60] sm:$0xf]
        %v728 = vld [vmem:[#allocation5 + $0x64] sm:$0xf]
        %v729 = vld [vmem:[#allocation5 + $0x68] sm:$0xf]
        %v730 = vld [vmem:[#allocation5 + $0x6c] sm:$0xf]
        %v731 = vld [vmem:[#allocation5 + $0x70] sm:$0xf]
        %v732 = vld [vmem:[#allocation5 + $0x74] sm:$0xf]
        %v733 = vld [vmem:[#allocation5 + $0x78] sm:$0xf]
        %v734 = vld [vmem:[#allocation5 + $0x7c] sm:$0xf]
        %v735 = vld [vmem:[#allocation5 + $0x80] sm:$0xf]
        %v736 = vld [vmem:[#allocation5 + $0x84] sm:$0xf]
        %v737 = vld [vmem:[#allocation5 + $0x88] sm:$0xf]
        %v738 = vld [vmem:[#allocation5 + $0x8c] sm:$0xf]
        %v739 = vld [vmem:[#allocation5 + $0x90] sm:$0xf]
        %v740 = vld [vmem:[#allocation5 + $0x94] sm:$0xf]
        %v741 = vld [vmem:[#allocation5 + $0x98] sm:$0xf]
        %v742 = vld [vmem:[#allocation5 + $0x9c] sm:$0xf]
        %v743 = vld [vmem:[#allocation5 + $0xa0] sm:$0xf]
        %v744 = vld [vmem:[#allocation5 + $0xa4] sm:$0xf]
        %v745 = vld [vmem:[#allocation5 + $0xa8] sm:$0xf]
        %v746 = vld [vmem:[#allocation5 + $0xac] sm:$0xf]
        %v747 = vld [vmem:[#allocation5 + $0xb0] sm:$0xf]
        %v748 = vld [vmem:[#allocation5 + $0xb4] sm:$0xf]
        %v749 = vld [vmem:[#allocation5 + $0xb8] sm:$0xf]
        %v750 = vld [vmem:[#allocation5 + $0xbc] sm:$0xf]
        %v751 = vld [vmem:[%s2] sm:$0x1]
        %v752 = vld [vmem:[#allocation7] sm:$0xf]
        %v753 = vld [vmem:[#allocation7 + $0x4] sm:$0xf]
        %v754 = vld [vmem:[#allocation7 + $0x8] sm:$0xf]
        %v755 = vld [vmem:[#allocation7 + $0xc] sm:$0xf]
        %v756 = vld [vmem:[#allocation7 + $0x10] sm:$0xf]
        %v757 = vld [vmem:[#allocation7 + $0x14] sm:$0xf]
        %v758 = vld [vmem:[#allocation7 + $0x18] sm:$0xf]
        %v759 = vld [vmem:[#allocation7 + $0x1c] sm:$0xf]
        %v760 = vld [vmem:[#allocation7 + $0x20] sm:$0xf]
        %v761 = vld [vmem:[#allocation7 + $0x24] sm:$0xf]
        %v762 = vld [vmem:[#allocation7 + $0x28] sm:$0xf]
        %v763 = vld [vmem:[#allocation7 + $0x2c] sm:$0xf]
        %v764 = vld [vmem:[#allocation7 + $0x30] sm:$0xf]
        %v765 = vld [vmem:[#allocation7 + $0x34] sm:$0xf]
        %v766 = vld [vmem:[#allocation7 + $0x38] sm:$0xf]
        %v767 = vld [vmem:[#allocation7 + $0x3c] sm:$0xf]
        %v768 = vld [vmem:[#allocation7 + $0x40] sm:$0xf]
        %v769 = vld [vmem:[#allocation7 + $0x44] sm:$0xf]
        %v770 = vld [vmem:[#allocation7 + $0x48] sm:$0xf]
        %v771 = vld [vmem:[#allocation7 + $0x4c] sm:$0xf]
        %v772 = vld [vmem:[#allocation7 + $0x50] sm:$0xf]
        %v773 = vld [vmem:[#allocation7 + $0x54] sm:$0xf]
        %v774 = vld [vmem:[#allocation7 + $0x58] sm:$0xf]
        %v775 = vld [vmem:[#allocation7 + $0x5c] sm:$0xf]
        %v776 = vld [vmem:[#allocation7 + $0x60] sm:$0xf]
        %v777 = vld [vmem:[#allocation7 + $0x64] sm:$0xf]
        %v778 = vld [vmem:[#allocation7 + $0x68] sm:$0xf]
        %v779 = vld [vmem:[#allocation7 + $0x6c] sm:$0xf]
        %v780 = vld [vmem:[#allocation7 + $0x70] sm:$0xf]
        %v781 = vld [vmem:[#allocation7 + $0x74] sm:$0xf]
        %v782 = vld [vmem:[#allocation7 + $0x78] sm:$0xf]
        %v783 = vld [vmem:[#allocation7 + $0x7c] sm:$0xf]
        %v784 = vld [vmem:[#allocation7 + $0x80] sm:$0xf]
        %v785 = vld [vmem:[#allocation7 + $0x84] sm:$0xf]
        %v786 = vld [vmem:[#allocation7 + $0x88] sm:$0xf]
        %v787 = vld [vmem:[#allocation7 + $0x8c] sm:$0xf]
        %v788 = vld [vmem:[#allocation7 + $0x90] sm:$0xf]
        %v789 = vld [vmem:[#allocation7 + $0x94] sm:$0xf]
        %v790 = vld [vmem:[#allocation7 + $0x98] sm:$0xf]
        %v791 = vld [vmem:[#allocation7 + $0x9c] sm:$0xf]
        %v792 = vld [vmem:[#allocation7 + $0xa0] sm:$0xf]
        %v793 = vld [vmem:[#allocation7 + $0xa4] sm:$0xf]
        %v794 = vld [vmem:[#allocation7 + $0xa8] sm:$0xf]
        %v795 = vld [vmem:[#allocation7 + $0xac] sm:$0xf]
        %v796 = vld [vmem:[#allocation7 + $0xb0] sm:$0xf]
        %v797 = vld [vmem:[#allocation7 + $0xb4] sm:$0xf]
        %v798 = vld [vmem:[#allocation7 + $0xb8] sm:$0xf]
        %v799 = vld [vmem:[#allocation7 + $0xbc] sm:$0xf]
        %v800 = vld [vmem:[%s4] sm:$0x1]
        %vm804 = vcmask 1040384
        %v805 = vrot.slane 0.0, 7
        %v806 = vrot.slane %v701, 7
        %v807 = vsel %vm804, %v805, %v806
        %v808 = vrot.slane %v702, 7
        %v809 = vsel %vm804, %v806, %v808
        %vm812 = vcmask 1041408
        %v813 = vrot.slane 0.0, 6
        %v814 = vrot.slane %v701, 6
        %v815 = vsel %vm812, %v813, %v814
        %v816 = vrot.slane %v702, 6
        %v817 = vsel %vm812, %v814, %v816
        %v820 = vpack.c.bf16 %v702, %v701
        %v821 = vpack.c.bf16 %v809, %v807
        %v822 = vpack.c.bf16 %v817, %v815
        %v824 = vperm.slane %v751, 0
        %v874 = vunpack.c.l.b16 %v703
        %v875 = vunpack.c.l.b16 %v704
        %v876 = vunpack.c.l.b16 %v705
        %v877 = vunpack.c.l.b16 %v706
        %v878 = vunpack.c.l.b16 %v707
        %v879 = vunpack.c.l.b16 %v708
        %v880 = vunpack.c.l.b16 %v709
        %v881 = vunpack.c.l.b16 %v710
        %v882 = vunpack.c.l.b16 %v711
        %v883 = vunpack.c.l.b16 %v712
        %v884 = vunpack.c.l.b16 %v713
        %v885 = vunpack.c.l.b16 %v714
        %v886 = vunpack.c.l.b16 %v715
        %v887 = vunpack.c.l.b16 %v716
        %v888 = vunpack.c.l.b16 %v717
        %v889 = vunpack.c.l.b16 %v718
        %v890 = vunpack.c.l.b16 %v719
        %v891 = vunpack.c.l.b16 %v720
        %v892 = vunpack.c.l.b16 %v721
        %v893 = vunpack.c.l.b16 %v722
        %v894 = vunpack.c.l.b16 %v723
        %v895 = vunpack.c.l.b16 %v724
        %v896 = vunpack.c.l.b16 %v725
        %v897 = vunpack.c.l.b16 %v726
        %v898 = vunpack.c.l.b16 %v727
        %v899 = vunpack.c.l.b16 %v728
        %v900 = vunpack.c.l.b16 %v729
        %v901 = vunpack.c.l.b16 %v730
        %v902 = vunpack.c.l.b16 %v731
        %v903 = vunpack.c.l.b16 %v732
        %v904 = vunpack.c.l.b16 %v733
        %v905 = vunpack.c.l.b16 %v734
        %v906 = vunpack.c.l.b16 %v735
        %v907 = vunpack.c.l.b16 %v736
        %v908 = vunpack.c.l.b16 %v737
        %v909 = vunpack.c.l.b16 %v738
        %v910 = vunpack.c.l.b16 %v739
        %v911 = vunpack.c.l.b16 %v740
        %v912 = vunpack.c.l.b16 %v741
        %v913 = vunpack.c.l.b16 %v742
        %v914 = vunpack.c.l.b16 %v743
        %v915 = vunpack.c.l.b16 %v744
        %v916 = vunpack.c.l.b16 %v745
        %v917 = vunpack.c.l.b16 %v746
        %v918 = vunpack.c.l.b16 %v747
        %v919 = vunpack.c.l.b16 %v748
        %v920 = vunpack.c.l.b16 %v749
        %v921 = vunpack.c.l.b16 %v750
        %v922 = vpack.c.b16 %v875, %v874
        %v923 = vpack.c.b16 %v877, %v876
        %v924 = vpack.c.b16 %v879, %v878
        %v925 = vpack.c.b16 %v881, %v880
        %v926 = vpack.c.b16 %v883, %v882
        %v927 = vpack.c.b16 %v885, %v884
        %v928 = vpack.c.b16 %v887, %v886
        %v929 = vpack.c.b16 %v889, %v888
        %v930 = vpack.c.b16 %v891, %v890
        %v931 = vpack.c.b16 %v893, %v892
        %v932 = vpack.c.b16 %v895, %v894
        %v933 = vpack.c.b16 %v897, %v896
        %v934 = vpack.c.b16 %v899, %v898
        %v935 = vpack.c.b16 %v901, %v900
        %v936 = vpack.c.b16 %v903, %v902
        %v937 = vpack.c.b16 %v905, %v904
        %v938 = vpack.c.b16 %v907, %v906
        %v939 = vpack.c.b16 %v909, %v908
        %v940 = vpack.c.b16 %v911, %v910
        %v941 = vpack.c.b16 %v913, %v912
        %v942 = vpack.c.b16 %v915, %v914
        %v943 = vpack.c.b16 %v917, %v916
        %v944 = vpack.c.b16 %v919, %v918
        %v945 = vpack.c.b16 %v921, %v920
        %970 = vmatpush.bf16.msra.mxu0 %v929
        %971 = vmatpush.bf16.msra.mxu0 %v928
        %972 = vmatpush.bf16.msra.mxu0 %v927
        %973 = vmatpush.bf16.msra.mxu0 %v926
        %974 = vmatpush.bf16.msra.mxu0 %v925
        %975 = vmatpush.bf16.msra.mxu0 %v924
        %976 = vmatpush.bf16.msra.mxu0 %v923
        %977 = vmatpush.bf16.msra.mxu0 %v922
        %978 = vmatmul.bf16.gmra.mxu0 %v820
        %v979 = vpop.f32.mrf.mxu0
        %v980 = vadd.f32 %v824, %v979
        %v981 = vpop.f32.mrf.mxu0
        %v982 = vadd.f32 %v824, %v981
        %983 = vdwg.mxu0
        %984 = vmatpush.bf16.msra.mxu0 %v937
        %985 = vmatpush.bf16.msra.mxu0 %v936
        %986 = vmatpush.bf16.msra.mxu0 %v935
        %987 = vmatpush.bf16.msra.mxu0 %v934
        %988 = vmatpush.bf16.msra.mxu0 %v933
        %989 = vmatpush.bf16.msra.mxu0 %v932
        %990 = vmatpush.bf16.msra.mxu0 %v931
        %991 = vmatpush.bf16.msra.mxu0 %v930
        %992 = vmatmul.bf16.gmra.mxu0 %v821
        %v993 = vpop.f32.mrf.mxu0
        %v994 = vadd.f32 %v980, %v993
        %v995 = vpop.f32.mrf.mxu0
        %v996 = vadd.f32 %v982, %v995
        %997 = vdwg.mxu0
        %998 = vmatpush.bf16.msra.mxu0 %v945
        %999 = vmatpush.bf16.msra.mxu0 %v944
        %1000 = vmatpush.bf16.msra.mxu0 %v943
        %1001 = vmatpush.bf16.msra.mxu0 %v942
        %1002 = vmatpush.bf16.msra.mxu0 %v941
        %1003 = vmatpush.bf16.msra.mxu0 %v940
        %1004 = vmatpush.bf16.msra.mxu0 %v939
        %1005 = vmatpush.bf16.msra.mxu0 %v938
        %1006 = vmatmul.bf16.gmra.mxu0 %v822
        %v1007 = vpop.f32.mrf.mxu0
        %v1008 = vadd.f32 %v994, %v1007
        %v1009 = vpop.f32.mrf.mxu0
        %v1010 = vadd.f32 %v996, %v1009
        %1011 = vdwg.mxu0
        %v1012 = vmax.f32 %v1008, 0.0
        %v1013 = vmax.f32 %v1010, 0.0
        %v1016 = vrot.slane %v1012, 7
        %v1017 = vsel %vm804, %v805, %v1016
        %v1018 = vrot.slane %v1013, 7
        %v1019 = vsel %vm804, %v1016, %v1018
        %v1022 = vrot.slane %v1012, 6
        %v1023 = vsel %vm812, %v813, %v1022
        %v1024 = vrot.slane %v1013, 6
        %v1025 = vsel %vm812, %v1022, %v1024
        %v1028 = vpack.c.bf16 %v1013, %v1012
        %v1029 = vpack.c.bf16 %v1019, %v1017
        %v1030 = vpack.c.bf16 %v1025, %v1023
        %v1032 = vperm.slane %v800, 0
        %v1082 = vunpack.c.l.b16 %v752
        %v1083 = vunpack.c.l.b16 %v753
        %v1084 = vunpack.c.l.b16 %v754
        %v1085 = vunpack.c.l.b16 %v755
        %v1086 = vunpack.c.l.b16 %v756
        %v1087 = vunpack.c.l.b16 %v757
        %v1088 = vunpack.c.l.b16 %v758
        %v1089 = vunpack.c.l.b16 %v759
        %v1090 = vunpack.c.l.b16 %v760
        %v1091 = vunpack.c.l.b16 %v761
        %v1092 = vunpack.c.l.b16 %v762
        %v1093 = vunpack.c.l.b16 %v763
        %v1094 = vunpack.c.l.b16 %v764
        %v1095 = vunpack.c.l.b16 %v765
        %v1096 = vunpack.c.l.b16 %v766
        %v1097 = vunpack.c.l.b16 %v767
        %v1098 = vunpack.c.l.b16 %v768
        %v1099 = vunpack.c.l.b16 %v769
        %v1100 = vunpack.c.l.b16 %v770
        %v1101 = vunpack.c.l.b16 %v771
        %v1102 = vunpack.c.l.b16 %v772
        %v1103 = vunpack.c.l.b16 %v773
        %v1104 = vunpack.c.l.b16 %v774
        %v1105 = vunpack.c.l.b16 %v775
        %v1106 = vunpack.c.l.b16 %v776
        %v1107 = vunpack.c.l.b16 %v777
        %v1108 = vunpack.c.l.b16 %v778
        %v1109 = vunpack.c.l.b16 %v779
        %v1110 = vunpack.c.l.b16 %v780
        %v1111 = vunpack.c.l.b16 %v781
        %v1112 = vunpack.c.l.b16 %v782
        %v1113 = vunpack.c.l.b16 %v783
        %v1114 = vunpack.c.l.b16 %v784
        %v1115 = vunpack.c.l.b16 %v785
        %v1116 = vunpack.c.l.b16 %v786
        %v1117 = vunpack.c.l.b16 %v787
        %v1118 = vunpack.c.l.b16 %v788
        %v1119 = vunpack.c.l.b16 %v789
        %v1120 = vunpack.c.l.b16 %v790
        %v1121 = vunpack.c.l.b16 %v791
        %v1122 = vunpack.c.l.b16 %v792
        %v1123 = vunpack.c.l.b16 %v793
        %v1124 = vunpack.c.l.b16 %v794
        %v1125 = vunpack.c.l.b16 %v795
        %v1126 = vunpack.c.l.b16 %v796
        %v1127 = vunpack.c.l.b16 %v797
        %v1128 = vunpack.c.l.b16 %v798
        %v1129 = vunpack.c.l.b16 %v799
        %v1130 = vpack.c.b16 %v1083, %v1082
        %v1131 = vpack.c.b16 %v1085, %v1084
        %v1132 = vpack.c.b16 %v1087, %v1086
        %v1133 = vpack.c.b16 %v1089, %v1088
        %v1134 = vpack.c.b16 %v1091, %v1090
        %v1135 = vpack.c.b16 %v1093, %v1092
        %v1136 = vpack.c.b16 %v1095, %v1094
        %v1137 = vpack.c.b16 %v1097, %v1096
        %v1138 = vpack.c.b16 %v1099, %v1098
        %v1139 = vpack.c.b16 %v1101, %v1100
        %v1140 = vpack.c.b16 %v1103, %v1102
        %v1141 = vpack.c.b16 %v1105, %v1104
        %v1142 = vpack.c.b16 %v1107, %v1106
        %v1143 = vpack.c.b16 %v1109, %v1108
        %v1144 = vpack.c.b16 %v1111, %v1110
        %v1145 = vpack.c.b16 %v1113, %v1112
        %v1146 = vpack.c.b16 %v1115, %v1114
        %v1147 = vpack.c.b16 %v1117, %v1116
        %v1148 = vpack.c.b16 %v1119, %v1118
        %v1149 = vpack.c.b16 %v1121, %v1120
        %v1150 = vpack.c.b16 %v1123, %v1122
        %v1151 = vpack.c.b16 %v1125, %v1124
        %v1152 = vpack.c.b16 %v1127, %v1126
        %v1153 = vpack.c.b16 %v1129, %v1128
        %1178 = vmatpush.bf16.msra.mxu0 %v1137
        %1179 = vmatpush.bf16.msra.mxu0 %v1136
        %1180 = vmatpush.bf16.msra.mxu0 %v1135
        %1181 = vmatpush.bf16.msra.mxu0 %v1134
        %1182 = vmatpush.bf16.msra.mxu0 %v1133
        %1183 = vmatpush.bf16.msra.mxu0 %v1132
        %1184 = vmatpush.bf16.msra.mxu0 %v1131
        %1185 = vmatpush.bf16.msra.mxu0 %v1130
        %1186 = vmatmul.bf16.gmra.mxu0 %v1028
        %v1187 = vpop.f32.mrf.mxu0
        %v1188 = vadd.f32 %v1032, %v1187
        %v1189 = vpop.f32.mrf.mxu0
        %v1190 = vadd.f32 %v1032, %v1189
        %1191 = vdwg.mxu0
        %1192 = vmatpush.bf16.msra.mxu0 %v1145
        %1193 = vmatpush.bf16.msra.mxu0 %v1144
        %1194 = vmatpush.bf16.msra.mxu0 %v1143
        %1195 = vmatpush.bf16.msra.mxu0 %v1142
        %1196 = vmatpush.bf16.msra.mxu0 %v1141
        %1197 = vmatpush.bf16.msra.mxu0 %v1140
        %1198 = vmatpush.bf16.msra.mxu0 %v1139
        %1199 = vmatpush.bf16.msra.mxu0 %v1138
        %1200 = vmatmul.bf16.gmra.mxu0 %v1029
        %v1201 = vpop.f32.mrf.mxu0
        %v1202 = vadd.f32 %v1188, %v1201
        %v1203 = vpop.f32.mrf.mxu0
        %v1204 = vadd.f32 %v1190, %v1203
        %1205 = vdwg.mxu0
        %1206 = vmatpush.bf16.msra.mxu0 %v1153
        %1207 = vmatpush.bf16.msra.mxu0 %v1152
        %1208 = vmatpush.bf16.msra.mxu0 %v1151
        %1209 = vmatpush.bf16.msra.mxu0 %v1150
        %1210 = vmatpush.bf16.msra.mxu0 %v1149
        %1211 = vmatpush.bf16.msra.mxu0 %v1148
        %1212 = vmatpush.bf16.msra.mxu0 %v1147
        %1213 = vmatpush.bf16.msra.mxu0 %v1146
        %1214 = vmatmul.bf16.gmra.mxu0 %v1030
        %v1215 = vpop.f32.mrf.mxu0
        %v1216 = vadd.f32 %v1202, %v1215
        %v1217 = vpop.f32.mrf.mxu0
        %v1218 = vadd.f32 %v1204, %v1217
        %1219 = vdwg.mxu0
        %v1220 = vmax.f32 %v1216, 0.0
        %v1221 = vmax.f32 %v1218, 0.0
        %v1222 = vld [vmem:[#allocation8] sm:$0xf]
        %v1223 = vld [vmem:[#allocation8 + $0x4] sm:$0xf]
        %v1224 = vld [vmem:[#allocation8 + $0x8] sm:$0xf]
        %v1225 = vld [vmem:[#allocation8 + $0xc] sm:$0xf]
        %v1226 = vld [vmem:[#allocation8 + $0x10] sm:$0xf]
        %v1227 = vld [vmem:[#allocation8 + $0x14] sm:$0xf]
        %v1228 = vld [vmem:[#allocation8 + $0x18] sm:$0xf]
        %v1229 = vld [vmem:[#allocation8 + $0x1c] sm:$0xf]
        %v1230 = vld [vmem:[#allocation8 + $0x20] sm:$0xf]
        %v1231 = vld [vmem:[#allocation8 + $0x24] sm:$0xf]
        %v1232 = vld [vmem:[#allocation8 + $0x28] sm:$0xf]
        %v1233 = vld [vmem:[#allocation8 + $0x2c] sm:$0xf]
        %v1234 = vld [vmem:[#allocation8 + $0x30] sm:$0xf]
        %v1235 = vld [vmem:[#allocation8 + $0x34] sm:$0xf]
        %v1236 = vld [vmem:[#allocation8 + $0x38] sm:$0xf]
        %v1237 = vld [vmem:[#allocation8 + $0x3c] sm:$0xf]
        %v1238 = vld [vmem:[%s6] sm:$0x1]
        %v1240 = vperm.slane %v1238, 0
        %v1258 = vunpack.c.l.b16 %v1222
        %v1259 = vunpack.c.l.b16 %v1223
        %v1260 = vunpack.c.l.b16 %v1224
        %v1261 = vunpack.c.l.b16 %v1225
        %v1262 = vunpack.c.l.b16 %v1226
        %v1263 = vunpack.c.l.b16 %v1227
        %v1264 = vunpack.c.l.b16 %v1228
        %v1265 = vunpack.c.l.b16 %v1229
        %v1266 = vunpack.c.l.b16 %v1230
        %v1267 = vunpack.c.l.b16 %v1231
        %v1268 = vunpack.c.l.b16 %v1232
        %v1269 = vunpack.c.l.b16 %v1233
        %v1270 = vunpack.c.l.b16 %v1234
        %v1271 = vunpack.c.l.b16 %v1235
        %v1272 = vunpack.c.l.b16 %v1236
        %v1273 = vunpack.c.l.b16 %v1237
        %v1274 = vpack.c.b16 %v1259, %v1258
        %v1275 = vpack.c.b16 %v1261, %v1260
        %v1276 = vpack.c.b16 %v1263, %v1262
        %v1277 = vpack.c.b16 %v1265, %v1264
        %v1278 = vpack.c.b16 %v1267, %v1266
        %v1279 = vpack.c.b16 %v1269, %v1268
        %v1280 = vpack.c.b16 %v1271, %v1270
        %v1281 = vpack.c.b16 %v1273, %v1272
        %1290 = vmatpush.bf16.msra.mxu0 %v1281
        %1291 = vmatpush.bf16.msra.mxu0 %v1280
        %1292 = vmatpush.bf16.msra.mxu0 %v1279
        %1293 = vmatpush.bf16.msra.mxu0 %v1278
        %1294 = vmatpush.bf16.msra.mxu0 %v1277
        %1295 = vmatpush.bf16.msra.mxu0 %v1276
        %1296 = vmatpush.bf16.msra.mxu0 %v1275
        %1297 = vmatpush.bf16.msra.mxu0 %v1274
        %1298 = vmatmul.bf16.gmra.mxu0 %v820
        %v1299 = vpop.f32.mrf.mxu0
        %v1300 = vadd.f32 %v1240, %v1299
        %v1301 = vpop.f32.mrf.mxu0
        %v1302 = vadd.f32 %v1240, %v1301
        %1303 = vdwg.mxu0
        %v1304 = vadd.f32 %v1220, %v1300
        %v1305 = vadd.f32 %v1221, %v1302
        %v1306 = vmax.f32 %v1304, 0.0
        %v1307 = vmax.f32 %v1305, 0.0
        %v1308 = vld [vmem:[#allocation10] sm:$0xf]
        %v1309 = vld [vmem:[#allocation10 + $0x4] sm:$0xf]
        %v1310 = vld [vmem:[#allocation10 + $0x8] sm:$0xf]
        %v1311 = vld [vmem:[#allocation10 + $0xc] sm:$0xf]
        %v1312 = vld [vmem:[#allocation10 + $0x10] sm:$0xf]
        %v1313 = vld [vmem:[#allocation10 + $0x14] sm:$0xf]
        %v1314 = vld [vmem:[#allocation10 + $0x18] sm:$0xf]
        %v1315 = vld [vmem:[#allocation10 + $0x1c] sm:$0xf]
        %v1316 = vld [vmem:[#allocation10 + $0x20] sm:$0xf]
        %v1317 = vld [vmem:[#allocation10 + $0x24] sm:$0xf]
        %v1318 = vld [vmem:[#allocation10 + $0x28] sm:$0xf]
        %v1319 = vld [vmem:[#allocation10 + $0x2c] sm:$0xf]
        %v1320 = vld [vmem:[#allocation10 + $0x30] sm:$0xf]
        %v1321 = vld [vmem:[#allocation10 + $0x34] sm:$0xf]
        %v1322 = vld [vmem:[#allocation10 + $0x38] sm:$0xf]
        %v1323 = vld [vmem:[#allocation10 + $0x3c] sm:$0xf]
        %v1324 = vld [vmem:[#allocation10 + $0x40] sm:$0xf]
        %v1325 = vld [vmem:[#allocation10 + $0x44] sm:$0xf]
        %v1326 = vld [vmem:[#allocation10 + $0x48] sm:$0xf]
        %v1327 = vld [vmem:[#allocation10 + $0x4c] sm:$0xf]
        %v1328 = vld [vmem:[#allocation10 + $0x50] sm:$0xf]
        %v1329 = vld [vmem:[#allocation10 + $0x54] sm:$0xf]
        %v1330 = vld [vmem:[#allocation10 + $0x58] sm:$0xf]
        %v1331 = vld [vmem:[#allocation10 + $0x5c] sm:$0xf]
        %v1332 = vld [vmem:[#allocation10 + $0x60] sm:$0xf]
        %v1333 = vld [vmem:[#allocation10 + $0x64] sm:$0xf]
        %v1334 = vld [vmem:[#allocation10 + $0x68] sm:$0xf]
        %v1335 = vld [vmem:[#allocation10 + $0x6c] sm:$0xf]
        %v1336 = vld [vmem:[#allocation10 + $0x70] sm:$0xf]
        %v1337 = vld [vmem:[#allocation10 + $0x74] sm:$0xf]
        %v1338 = vld [vmem:[#allocation10 + $0x78] sm:$0xf]
        %v1339 = vld [vmem:[#allocation10 + $0x7c] sm:$0xf]
        %v1340 = vld [vmem:[#allocation10 + $0x80] sm:$0xf]
        %v1341 = vld [vmem:[#allocation10 + $0x84] sm:$0xf]
        %v1342 = vld [vmem:[#allocation10 + $0x88] sm:$0xf]
        %v1343 = vld [vmem:[#allocation10 + $0x8c] sm:$0xf]
        %v1344 = vld [vmem:[#allocation10 + $0x90] sm:$0xf]
        %v1345 = vld [vmem:[#allocation10 + $0x94] sm:$0xf]
        %v1346 = vld [vmem:[#allocation10 + $0x98] sm:$0xf]
        %v1347 = vld [vmem:[#allocation10 + $0x9c] sm:$0xf]
        %v1348 = vld [vmem:[#allocation10 + $0xa0] sm:$0xf]
        %v1349 = vld [vmem:[#allocation10 + $0xa4] sm:$0xf]
        %v1350 = vld [vmem:[#allocation10 + $0xa8] sm:$0xf]
        %v1351 = vld [vmem:[#allocation10 + $0xac] sm:$0xf]
        %v1352 = vld [vmem:[#allocation10 + $0xb0] sm:$0xf]
        %v1353 = vld [vmem:[#allocation10 + $0xb4] sm:$0xf]
        %v1354 = vld [vmem:[#allocation10 + $0xb8] sm:$0xf]
        %v1355 = vld [vmem:[#allocation10 + $0xbc] sm:$0xf]
        %v1356 = vld [vmem:[%s8] sm:$0x1]
        %v1357 = vld [vmem:[#allocation11] sm:$0xf]
        %v1358 = vld [vmem:[#allocation11 + $0x4] sm:$0xf]
        %v1359 = vld [vmem:[#allocation11 + $0x8] sm:$0xf]
        %v1360 = vld [vmem:[#allocation11 + $0xc] sm:$0xf]
        %v1361 = vld [vmem:[#allocation11 + $0x10] sm:$0xf]
        %v1362 = vld [vmem:[#allocation11 + $0x14] sm:$0xf]
        %v1363 = vld [vmem:[#allocation11 + $0x18] sm:$0xf]
        %v1364 = vld [vmem:[#allocation11 + $0x1c] sm:$0xf]
        %v1365 = vld [vmem:[#allocation11 + $0x20] sm:$0xf]
        %v1366 = vld [vmem:[#allocation11 + $0x24] sm:$0xf]
        %v1367 = vld [vmem:[#allocation11 + $0x28] sm:$0xf]
        %v1368 = vld [vmem:[#allocation11 + $0x2c] sm:$0xf]
        %v1369 = vld [vmem:[#allocation11 + $0x30] sm:$0xf]
        %v1370 = vld [vmem:[#allocation11 + $0x34] sm:$0xf]
        %v1371 = vld [vmem:[#allocation11 + $0x38] sm:$0xf]
        %v1372 = vld [vmem:[#allocation11 + $0x3c] sm:$0xf]
        %v1373 = vld [vmem:[#allocation11 + $0x40] sm:$0xf]
        %v1374 = vld [vmem:[#allocation11 + $0x44] sm:$0xf]
        %v1375 = vld [vmem:[#allocation11 + $0x48] sm:$0xf]
        %v1376 = vld [vmem:[#allocation11 + $0x4c] sm:$0xf]
        %v1377 = vld [vmem:[#allocation11 + $0x50] sm:$0xf]
        %v1378 = vld [vmem:[#allocation11 + $0x54] sm:$0xf]
        %v1379 = vld [vmem:[#allocation11 + $0x58] sm:$0xf]
        %v1380 = vld [vmem:[#allocation11 + $0x5c] sm:$0xf]
        %v1381 = vld [vmem:[#allocation11 + $0x60] sm:$0xf]
        %v1382 = vld [vmem:[#allocation11 + $0x64] sm:$0xf]
        %v1383 = vld [vmem:[#allocation11 + $0x68] sm:$0xf]
        %v1384 = vld [vmem:[#allocation11 + $0x6c] sm:$0xf]
        %v1385 = vld [vmem:[#allocation11 + $0x70] sm:$0xf]
        %v1386 = vld [vmem:[#allocation11 + $0x74] sm:$0xf]
        %v1387 = vld [vmem:[#allocation11 + $0x78] sm:$0xf]
        %v1388 = vld [vmem:[#allocation11 + $0x7c] sm:$0xf]
        %v1389 = vld [vmem:[#allocation11 + $0x80] sm:$0xf]
        %v1390 = vld [vmem:[#allocation11 + $0x84] sm:$0xf]
        %v1391 = vld [vmem:[#allocation11 + $0x88] sm:$0xf]
        %v1392 = vld [vmem:[#allocation11 + $0x8c] sm:$0xf]
        %v1393 = vld [vmem:[#allocation11 + $0x90] sm:$0xf]
        %v1394 = vld [vmem:[#allocation11 + $0x94] sm:$0xf]
        %v1395 = vld [vmem:[#allocation11 + $0x98] sm:$0xf]
        %v1396 = vld [vmem:[#allocation11 + $0x9c] sm:$0xf]
        %v1397 = vld [vmem:[#allocation11 + $0xa0] sm:$0xf]
        %v1398 = vld [vmem:[#allocation11 + $0xa4] sm:$0xf]
        %v1399 = vld [vmem:[#allocation11 + $0xa8] sm:$0xf]
        %v1400 = vld [vmem:[#allocation11 + $0xac] sm:$0xf]
        %v1401 = vld [vmem:[#allocation11 + $0xb0] sm:$0xf]
        %v1402 = vld [vmem:[#allocation11 + $0xb4] sm:$0xf]
        %v1403 = vld [vmem:[#allocation11 + $0xb8] sm:$0xf]
        %v1404 = vld [vmem:[#allocation11 + $0xbc] sm:$0xf]
        %v1405 = vld [vmem:[%s10] sm:$0x1]
        %v1408 = vrot.slane %v1306, 6
        %v1409 = vsel %vm812, %v813, %v1408
        %v1410 = vrot.slane %v1307, 6
        %v1411 = vsel %vm812, %v1408, %v1410
        %vm1414 = vcmask 1043456
        %v1415 = vrot.slane 0.0, 4
        %v1416 = vrot.slane %v1306, 4
        %v1417 = vsel %vm1414, %v1415, %v1416
        %v1418 = vrot.slane %v1307, 4
        %v1419 = vsel %vm1414, %v1416, %v1418
        %v1422 = vpack.c.bf16 %v1307, %v1306
        %v1423 = vpack.c.bf16 %v1411, %v1409
        %v1424 = vpack.c.bf16 %v1419, %v1417
        %v1426 = vperm.slane %v1356, 0
        %v1476 = vunpack.c.l.b16 %v1308
        %v1477 = vunpack.c.l.b16 %v1309
        %v1478 = vunpack.c.l.b16 %v1310
        %v1479 = vunpack.c.l.b16 %v1311
        %v1480 = vunpack.c.l.b16 %v1312
        %v1481 = vunpack.c.l.b16 %v1313
        %v1482 = vunpack.c.l.b16 %v1314
        %v1483 = vunpack.c.l.b16 %v1315
        %v1484 = vunpack.c.l.b16 %v1316
        %v1485 = vunpack.c.l.b16 %v1317
        %v1486 = vunpack.c.l.b16 %v1318
        %v1487 = vunpack.c.l.b16 %v1319
        %v1488 = vunpack.c.l.b16 %v1320
        %v1489 = vunpack.c.l.b16 %v1321
        %v1490 = vunpack.c.l.b16 %v1322
        %v1491 = vunpack.c.l.b16 %v1323
        %v1492 = vunpack.c.l.b16 %v1324
        %v1493 = vunpack.c.l.b16 %v1325
        %v1494 = vunpack.c.l.b16 %v1326
        %v1495 = vunpack.c.l.b16 %v1327
        %v1496 = vunpack.c.l.b16 %v1328
        %v1497 = vunpack.c.l.b16 %v1329
        %v1498 = vunpack.c.l.b16 %v1330
        %v1499 = vunpack.c.l.b16 %v1331
        %v1500 = vunpack.c.l.b16 %v1332
        %v1501 = vunpack.c.l.b16 %v1333
        %v1502 = vunpack.c.l.b16 %v1334
        %v1503 = vunpack.c.l.b16 %v1335
        %v1504 = vunpack.c.l.b16 %v1336
        %v1505 = vunpack.c.l.b16 %v1337
        %v1506 = vunpack.c.l.b16 %v1338
        %v1507 = vunpack.c.l.b16 %v1339
        %v1508 = vunpack.c.l.b16 %v1340
        %v1509 = vunpack.c.l.b16 %v1341
        %v1510 = vunpack.c.l.b16 %v1342
        %v1511 = vunpack.c.l.b16 %v1343
        %v1512 = vunpack.c.l.b16 %v1344
        %v1513 = vunpack.c.l.b16 %v1345
        %v1514 = vunpack.c.l.b16 %v1346
        %v1515 = vunpack.c.l.b16 %v1347
        %v1516 = vunpack.c.l.b16 %v1348
        %v1517 = vunpack.c.l.b16 %v1349
        %v1518 = vunpack.c.l.b16 %v1350
        %v1519 = vunpack.c.l.b16 %v1351
        %v1520 = vunpack.c.l.b16 %v1352
        %v1521 = vunpack.c.l.b16 %v1353
        %v1522 = vunpack.c.l.b16 %v1354
        %v1523 = vunpack.c.l.b16 %v1355
        %v1524 = vpack.c.b16 %v1477, %v1476
        %v1525 = vpack.c.b16 %v1479, %v1478
        %v1526 = vpack.c.b16 %v1481, %v1480
        %v1527 = vpack.c.b16 %v1483, %v1482
        %v1528 = vpack.c.b16 %v1485, %v1484
        %v1529 = vpack.c.b16 %v1487, %v1486
        %v1530 = vpack.c.b16 %v1489, %v1488
        %v1531 = vpack.c.b16 %v1491, %v1490
        %v1532 = vpack.c.b16 %v1493, %v1492
        %v1533 = vpack.c.b16 %v1495, %v1494
        %v1534 = vpack.c.b16 %v1497, %v1496
        %v1535 = vpack.c.b16 %v1499, %v1498
        %v1536 = vpack.c.b16 %v1501, %v1500
        %v1537 = vpack.c.b16 %v1503, %v1502
        %v1538 = vpack.c.b16 %v1505, %v1504
        %v1539 = vpack.c.b16 %v1507, %v1506
        %v1540 = vpack.c.b16 %v1509, %v1508
        %v1541 = vpack.c.b16 %v1511, %v1510
        %v1542 = vpack.c.b16 %v1513, %v1512
        %v1543 = vpack.c.b16 %v1515, %v1514
        %v1544 = vpack.c.b16 %v1517, %v1516
        %v1545 = vpack.c.b16 %v1519, %v1518
        %v1546 = vpack.c.b16 %v1521, %v1520
        %v1547 = vpack.c.b16 %v1523, %v1522
        %1572 = vmatpush.bf16.msra.mxu0 %v1531
        %1573 = vmatpush.bf16.msra.mxu0 %v1530
        %1574 = vmatpush.bf16.msra.mxu0 %v1529
        %1575 = vmatpush.bf16.msra.mxu0 %v1528
        %1576 = vmatpush.bf16.msra.mxu0 %v1527
        %1577 = vmatpush.bf16.msra.mxu0 %v1526
        %1578 = vmatpush.bf16.msra.mxu0 %v1525
        %1579 = vmatpush.bf16.msra.mxu0 %v1524
        %1580 = vmatmul.bf16.gmra.mxu0 %v1422
        %v1581 = vpop.f32.mrf.mxu0
        %v1582 = vadd.f32 %v1426, %v1581
        %v1583 = vpop.f32.mrf.mxu0
        %v1584 = vadd.f32 %v1426, %v1583
        %1585 = vdwg.mxu0
        %1586 = vmatpush.bf16.msra.mxu0 %v1539
        %1587 = vmatpush.bf16.msra.mxu0 %v1538
        %1588 = vmatpush.bf16.msra.mxu0 %v1537
        %1589 = vmatpush.bf16.msra.mxu0 %v1536
        %1590 = vmatpush.bf16.msra.mxu0 %v1535
        %1591 = vmatpush.bf16.msra.mxu0 %v1534
        %1592 = vmatpush.bf16.msra.mxu0 %v1533
        %1593 = vmatpush.bf16.msra.mxu0 %v1532
        %1594 = vmatmul.bf16.gmra.mxu0 %v1423
        %v1595 = vpop.f32.mrf.mxu0
        %v1596 = vadd.f32 %v1582, %v1595
        %v1597 = vpop.f32.mrf.mxu0
        %v1598 = vadd.f32 %v1584, %v1597
        %1599 = vdwg.mxu0
        %1600 = vmatpush.bf16.msra.mxu0 %v1547
        %1601 = vmatpush.bf16.msra.mxu0 %v1546
        %1602 = vmatpush.bf16.msra.mxu0 %v1545
        %1603 = vmatpush.bf16.msra.mxu0 %v1544
        %1604 = vmatpush.bf16.msra.mxu0 %v1543
        %1605 = vmatpush.bf16.msra.mxu0 %v1542
        %1606 = vmatpush.bf16.msra.mxu0 %v1541
        %1607 = vmatpush.bf16.msra.mxu0 %v1540
        %1608 = vmatmul.bf16.gmra.mxu0 %v1424
        %v1609 = vpop.f32.mrf.mxu0
        %v1610 = vadd.f32 %v1596, %v1609
        %v1611 = vpop.f32.mrf.mxu0
        %v1612 = vadd.f32 %v1598, %v1611
        %1613 = vdwg.mxu0
        %v1614 = vmax.f32 %v1610, 0.0
        %v1615 = vmax.f32 %v1612, 0.0
        %v1618 = vrot.slane %v1614, 6
        %v1619 = vsel %vm812, %v813, %v1618
        %v1620 = vrot.slane %v1615, 6
        %v1621 = vsel %vm812, %v1618, %v1620
        %v1624 = vrot.slane %v1614, 4
        %v1625 = vsel %vm1414, %v1415, %v1624
        %v1626 = vrot.slane %v1615, 4
        %v1627 = vsel %vm1414, %v1624, %v1626
        %v1630 = vpack.c.bf16 %v1615, %v1614
        %v1631 = vpack.c.bf16 %v1621, %v1619
        %v1632 = vpack.c.bf16 %v1627, %v1625
        %v1634 = vperm.slane %v1405, 0
        %v1684 = vunpack.c.l.b16 %v1357
        %v1685 = vunpack.c.l.b16 %v1358
        %v1686 = vunpack.c.l.b16 %v1359
        %v1687 = vunpack.c.l.b16 %v1360
        %v1688 = vunpack.c.l.b16 %v1361
        %v1689 = vunpack.c.l.b16 %v1362
        %v1690 = vunpack.c.l.b16 %v1363
        %v1691 = vunpack.c.l.b16 %v1364
        %v1692 = vunpack.c.l.b16 %v1365
        %v1693 = vunpack.c.l.b16 %v1366
        %v1694 = vunpack.c.l.b16 %v1367
        %v1695 = vunpack.c.l.b16 %v1368
        %v1696 = vunpack.c.l.b16 %v1369
        %v1697 = vunpack.c.l.b16 %v1370
        %v1698 = vunpack.c.l.b16 %v1371
        %v1699 = vunpack.c.l.b16 %v1372
        %v1700 = vunpack.c.l.b16 %v1373
        %v1701 = vunpack.c.l.b16 %v1374
        %v1702 = vunpack.c.l.b16 %v1375
        %v1703 = vunpack.c.l.b16 %v1376
        %v1704 = vunpack.c.l.b16 %v1377
        %v1705 = vunpack.c.l.b16 %v1378
        %v1706 = vunpack.c.l.b16 %v1379
        %v1707 = vunpack.c.l.b16 %v1380
        %v1708 = vunpack.c.l.b16 %v1381
        %v1709 = vunpack.c.l.b16 %v1382
        %v1710 = vunpack.c.l.b16 %v1383
        %v1711 = vunpack.c.l.b16 %v1384
        %v1712 = vunpack.c.l.b16 %v1385
        %v1713 = vunpack.c.l.b16 %v1386
        %v1714 = vunpack.c.l.b16 %v1387
        %v1715 = vunpack.c.l.b16 %v1388
        %v1716 = vunpack.c.l.b16 %v1389
        %v1717 = vunpack.c.l.b16 %v1390
        %v1718 = vunpack.c.l.b16 %v1391
        %v1719 = vunpack.c.l.b16 %v1392
        %v1720 = vunpack.c.l.b16 %v1393
        %v1721 = vunpack.c.l.b16 %v1394
        %v1722 = vunpack.c.l.b16 %v1395
        %v1723 = vunpack.c.l.b16 %v1396
        %v1724 = vunpack.c.l.b16 %v1397
        %v1725 = vunpack.c.l.b16 %v1398
        %v1726 = vunpack.c.l.b16 %v1399
        %v1727 = vunpack.c.l.b16 %v1400
        %v1728 = vunpack.c.l.b16 %v1401
        %v1729 = vunpack.c.l.b16 %v1402
        %v1730 = vunpack.c.l.b16 %v1403
        %v1731 = vunpack.c.l.b16 %v1404
        %v1732 = vpack.c.b16 %v1685, %v1684
        %v1733 = vpack.c.b16 %v1687, %v1686
        %v1734 = vpack.c.b16 %v1689, %v1688
        %v1735 = vpack.c.b16 %v1691, %v1690
        %v1736 = vpack.c.b16 %v1693, %v1692
        %v1737 = vpack.c.b16 %v1695, %v1694
        %v1738 = vpack.c.b16 %v1697, %v1696
        %v1739 = vpack.c.b16 %v1699, %v1698
        %v1740 = vpack.c.b16 %v1701, %v1700
        %v1741 = vpack.c.b16 %v1703, %v1702
        %v1742 = vpack.c.b16 %v1705, %v1704
        %v1743 = vpack.c.b16 %v1707, %v1706
        %v1744 = vpack.c.b16 %v1709, %v1708
        %v1745 = vpack.c.b16 %v1711, %v1710
        %v1746 = vpack.c.b16 %v1713, %v1712
        %v1747 = vpack.c.b16 %v1715, %v1714
        %v1748 = vpack.c.b16 %v1717, %v1716
        %v1749 = vpack.c.b16 %v1719, %v1718
        %v1750 = vpack.c.b16 %v1721, %v1720
        %v1751 = vpack.c.b16 %v1723, %v1722
        %v1752 = vpack.c.b16 %v1725, %v1724
        %v1753 = vpack.c.b16 %v1727, %v1726
        %v1754 = vpack.c.b16 %v1729, %v1728
        %v1755 = vpack.c.b16 %v1731, %v1730
        %1780 = vmatpush.bf16.msra.mxu0 %v1739
        %1781 = vmatpush.bf16.msra.mxu0 %v1738
        %1782 = vmatpush.bf16.msra.mxu0 %v1737
        %1783 = vmatpush.bf16.msra.mxu0 %v1736
        %1784 = vmatpush.bf16.msra.mxu0 %v1735
        %1785 = vmatpush.bf16.msra.mxu0 %v1734
        %1786 = vmatpush.bf16.msra.mxu0 %v1733
        %1787 = vmatpush.bf16.msra.mxu0 %v1732
        %1788 = vmatmul.bf16.gmra.mxu0 %v1630
        %v1789 = vpop.f32.mrf.mxu0
        %v1790 = vadd.f32 %v1634, %v1789
        %v1791 = vpop.f32.mrf.mxu0
        %v1792 = vadd.f32 %v1634, %v1791
        %1793 = vdwg.mxu0
        %1794 = vmatpush.bf16.msra.mxu0 %v1747
        %1795 = vmatpush.bf16.msra.mxu0 %v1746
        %1796 = vmatpush.bf16.msra.mxu0 %v1745
        %1797 = vmatpush.bf16.msra.mxu0 %v1744
        %1798 = vmatpush.bf16.msra.mxu0 %v1743
        %1799 = vmatpush.bf16.msra.mxu0 %v1742
        %1800 = vmatpush.bf16.msra.mxu0 %v1741
        %1801 = vmatpush.bf16.msra.mxu0 %v1740
        %1802 = vmatmul.bf16.gmra.mxu0 %v1631
        %v1803 = vpop.f32.mrf.mxu0
        %v1804 = vadd.f32 %v1790, %v1803
        %v1805 = vpop.f32.mrf.mxu0
        %v1806 = vadd.f32 %v1792, %v1805
        %1807 = vdwg.mxu0
        %1808 = vmatpush.bf16.msra.mxu0 %v1755
        %1809 = vmatpush.bf16.msra.mxu0 %v1754
        %1810 = vmatpush.bf16.msra.mxu0 %v1753
        %1811 = vmatpush.bf16.msra.mxu0 %v1752
        %1812 = vmatpush.bf16.msra.mxu0 %v1751
        %1813 = vmatpush.bf16.msra.mxu0 %v1750
        %1814 = vmatpush.bf16.msra.mxu0 %v1749
        %1815 = vmatpush.bf16.msra.mxu0 %v1748
        %1816 = vmatmul.bf16.gmra.mxu0 %v1632
        %v1817 = vpop.f32.mrf.mxu0
        %v1818 = vadd.f32 %v1804, %v1817
        %v1819 = vpop.f32.mrf.mxu0
        %v1820 = vadd.f32 %v1806, %v1819
        %1821 = vdwg.mxu0
        %v1822 = vmax.f32 %v1818, 0.0
        %v1823 = vmax.f32 %v1820, 0.0
        %v1824 = vadd.f32 %v1822, %v1306
        %v1825 = vadd.f32 %v1823, %v1307
        %v1826 = vmax.f32 %v1824, 0.0
        %v1827 = vmax.f32 %v1825, 0.0
        %v1828 = vld [vmem:[#allocation13] sm:$0xf]
        %v1829 = vld [vmem:[#allocation13 + $0x4] sm:$0xf]
        %v1830 = vld [vmem:[#allocation13 + $0x8] sm:$0xf]
        %v1831 = vld [vmem:[#allocation13 + $0xc] sm:$0xf]
        %v1832 = vld [vmem:[#allocation13 + $0x10] sm:$0xf]
        %v1833 = vld [vmem:[#allocation13 + $0x14] sm:$0xf]
        %v1834 = vld [vmem:[#allocation13 + $0x18] sm:$0xf]
        %v1835 = vld [vmem:[#allocation13 + $0x1c] sm:$0xf]
        %v1836 = vld [vmem:[#allocation13 + $0x20] sm:$0xf]
        %v1837 = vld [vmem:[#allocation13 + $0x24] sm:$0xf]
        %v1838 = vld [vmem:[#allocation13 + $0x28] sm:$0xf]
        %v1839 = vld [vmem:[#allocation13 + $0x2c] sm:$0xf]
        %v1840 = vld [vmem:[#allocation13 + $0x30] sm:$0xf]
        %v1841 = vld [vmem:[#allocation13 + $0x34] sm:$0xf]
        %v1842 = vld [vmem:[#allocation13 + $0x38] sm:$0xf]
        %v1843 = vld [vmem:[#allocation13 + $0x3c] sm:$0xf]
        %v1844 = vld [vmem:[#allocation13 + $0x40] sm:$0xf]
        %v1845 = vld [vmem:[#allocation13 + $0x44] sm:$0xf]
        %v1846 = vld [vmem:[#allocation13 + $0x48] sm:$0xf]
        %v1847 = vld [vmem:[#allocation13 + $0x4c] sm:$0xf]
        %v1848 = vld [vmem:[#allocation13 + $0x50] sm:$0xf]
        %v1849 = vld [vmem:[#allocation13 + $0x54] sm:$0xf]
        %v1850 = vld [vmem:[#allocation13 + $0x58] sm:$0xf]
        %v1851 = vld [vmem:[#allocation13 + $0x5c] sm:$0xf]
        %v1852 = vld [vmem:[#allocation13 + $0x60] sm:$0xf]
        %v1853 = vld [vmem:[#allocation13 + $0x64] sm:$0xf]
        %v1854 = vld [vmem:[#allocation13 + $0x68] sm:$0xf]
        %v1855 = vld [vmem:[#allocation13 + $0x6c] sm:$0xf]
        %v1856 = vld [vmem:[#allocation13 + $0x70] sm:$0xf]
        %v1857 = vld [vmem:[#allocation13 + $0x74] sm:$0xf]
        %v1858 = vld [vmem:[#allocation13 + $0x78] sm:$0xf]
        %v1859 = vld [vmem:[#allocation13 + $0x7c] sm:$0xf]
        %v1860 = vld [vmem:[#allocation13 + $0x80] sm:$0xf]
        %v1861 = vld [vmem:[#allocation13 + $0x84] sm:$0xf]
        %v1862 = vld [vmem:[#allocation13 + $0x88] sm:$0xf]
        %v1863 = vld [vmem:[#allocation13 + $0x8c] sm:$0xf]
        %v1864 = vld [vmem:[#allocation13 + $0x90] sm:$0xf]
        %v1865 = vld [vmem:[#allocation13 + $0x94] sm:$0xf]
        %v1866 = vld [vmem:[#allocation13 + $0x98] sm:$0xf]
        %v1867 = vld [vmem:[#allocation13 + $0x9c] sm:$0xf]
        %v1868 = vld [vmem:[#allocation13 + $0xa0] sm:$0xf]
        %v1869 = vld [vmem:[#allocation13 + $0xa4] sm:$0xf]
        %v1870 = vld [vmem:[#allocation13 + $0xa8] sm:$0xf]
        %v1871 = vld [vmem:[#allocation13 + $0xac] sm:$0xf]
        %v1872 = vld [vmem:[#allocation13 + $0xb0] sm:$0xf]
        %v1873 = vld [vmem:[#allocation13 + $0xb4] sm:$0xf]
        %v1874 = vld [vmem:[#allocation13 + $0xb8] sm:$0xf]
        %v1875 = vld [vmem:[#allocation13 + $0xbc] sm:$0xf]
        %v1876 = vld [vmem:[%s12] sm:$0x1]
        %v1877 = vld [vmem:[#allocation14] sm:$0xf]
        %v1878 = vld [vmem:[#allocation14 + $0x4] sm:$0xf]
        %v1879 = vld [vmem:[#allocation14 + $0x8] sm:$0xf]
        %v1880 = vld [vmem:[#allocation14 + $0xc] sm:$0xf]
        %v1881 = vld [vmem:[#allocation14 + $0x10] sm:$0xf]
        %v1882 = vld [vmem:[#allocation14 + $0x14] sm:$0xf]
        %v1883 = vld [vmem:[#allocation14 + $0x18] sm:$0xf]
        %v1884 = vld [vmem:[#allocation14 + $0x1c] sm:$0xf]
        %v1885 = vld [vmem:[#allocation14 + $0x20] sm:$0xf]
        %v1886 = vld [vmem:[#allocation14 + $0x24] sm:$0xf]
        %v1887 = vld [vmem:[#allocation14 + $0x28] sm:$0xf]
        %v1888 = vld [vmem:[#allocation14 + $0x2c] sm:$0xf]
        %v1889 = vld [vmem:[#allocation14 + $0x30] sm:$0xf]
        %v1890 = vld [vmem:[#allocation14 + $0x34] sm:$0xf]
        %v1891 = vld [vmem:[#allocation14 + $0x38] sm:$0xf]
        %v1892 = vld [vmem:[#allocation14 + $0x3c] sm:$0xf]
        %v1893 = vld [vmem:[#allocation14 + $0x40] sm:$0xf]
        %v1894 = vld [vmem:[#allocation14 + $0x44] sm:$0xf]
        %v1895 = vld [vmem:[#allocation14 + $0x48] sm:$0xf]
        %v1896 = vld [vmem:[#allocation14 + $0x4c] sm:$0xf]
        %v1897 = vld [vmem:[#allocation14 + $0x50] sm:$0xf]
        %v1898 = vld [vmem:[#allocation14 + $0x54] sm:$0xf]
        %v1899 = vld [vmem:[#allocation14 + $0x58] sm:$0xf]
        %v1900 = vld [vmem:[#allocation14 + $0x5c] sm:$0xf]
        %v1901 = vld [vmem:[#allocation14 + $0x60] sm:$0xf]
        %v1902 = vld [vmem:[#allocation14 + $0x64] sm:$0xf]
        %v1903 = vld [vmem:[#allocation14 + $0x68] sm:$0xf]
        %v1904 = vld [vmem:[#allocation14 + $0x6c] sm:$0xf]
        %v1905 = vld [vmem:[#allocation14 + $0x70] sm:$0xf]
        %v1906 = vld [vmem:[#allocation14 + $0x74] sm:$0xf]
        %v1907 = vld [vmem:[#allocation14 + $0x78] sm:$0xf]
        %v1908 = vld [vmem:[#allocation14 + $0x7c] sm:$0xf]
        %v1909 = vld [vmem:[#allocation14 + $0x80] sm:$0xf]
        %v1910 = vld [vmem:[#allocation14 + $0x84] sm:$0xf]
        %v1911 = vld [vmem:[#allocation14 + $0x88] sm:$0xf]
        %v1912 = vld [vmem:[#allocation14 + $0x8c] sm:$0xf]
        %v1913 = vld [vmem:[#allocation14 + $0x90] sm:$0xf]
        %v1914 = vld [vmem:[#allocation14 + $0x94] sm:$0xf]
        %v1915 = vld [vmem:[#allocation14 + $0x98] sm:$0xf]
        %v1916 = vld [vmem:[#allocation14 + $0x9c] sm:$0xf]
        %v1917 = vld [vmem:[#allocation14 + $0xa0] sm:$0xf]
        %v1918 = vld [vmem:[#allocation14 + $0xa4] sm:$0xf]
        %v1919 = vld [vmem:[#allocation14 + $0xa8] sm:$0xf]
        %v1920 = vld [vmem:[#allocation14 + $0xac] sm:$0xf]
        %v1921 = vld [vmem:[#allocation14 + $0xb0] sm:$0xf]
        %v1922 = vld [vmem:[#allocation14 + $0xb4] sm:$0xf]
        %v1923 = vld [vmem:[#allocation14 + $0xb8] sm:$0xf]
        %v1924 = vld [vmem:[#allocation14 + $0xbc] sm:$0xf]
        %v1925 = vld [vmem:[%s14] sm:$0x1]
        %v1928 = vrot.slane %v1826, 4
        %v1929 = vsel %vm1414, %v1415, %v1928
        %v1930 = vrot.slane %v1827, 4
        %v1931 = vsel %vm1414, %v1928, %v1930
        %v1934 = vpack.c.bf16 %v1827, %v1826
        %v1935 = vpack.c.bf16 %v1931, %v1929
        %v1936 = vpack.c.bf16 %v1826, 0.0
        %v1938 = vperm.slane %v1876, 0
        %v1988 = vunpack.c.l.b16 %v1828
        %v1989 = vunpack.c.l.b16 %v1829
        %v1990 = vunpack.c.l.b16 %v1830
        %v1991 = vunpack.c.l.b16 %v1831
        %v1992 = vunpack.c.l.b16 %v1832
        %v1993 = vunpack.c.l.b16 %v1833
        %v1994 = vunpack.c.l.b16 %v1834
        %v1995 = vunpack.c.l.b16 %v1835
        %v1996 = vunpack.c.l.b16 %v1836
        %v1997 = vunpack.c.l.b16 %v1837
        %v1998 = vunpack.c.l.b16 %v1838
        %v1999 = vunpack.c.l.b16 %v1839
        %v2000 = vunpack.c.l.b16 %v1840
        %v2001 = vunpack.c.l.b16 %v1841
        %v2002 = vunpack.c.l.b16 %v1842
        %v2003 = vunpack.c.l.b16 %v1843
        %v2004 = vunpack.c.l.b16 %v1844
        %v2005 = vunpack.c.l.b16 %v1845
        %v2006 = vunpack.c.l.b16 %v1846
        %v2007 = vunpack.c.l.b16 %v1847
        %v2008 = vunpack.c.l.b16 %v1848
        %v2009 = vunpack.c.l.b16 %v1849
        %v2010 = vunpack.c.l.b16 %v1850
        %v2011 = vunpack.c.l.b16 %v1851
        %v2012 = vunpack.c.l.b16 %v1852
        %v2013 = vunpack.c.l.b16 %v1853
        %v2014 = vunpack.c.l.b16 %v1854
        %v2015 = vunpack.c.l.b16 %v1855
        %v2016 = vunpack.c.l.b16 %v1856
        %v2017 = vunpack.c.l.b16 %v1857
        %v2018 = vunpack.c.l.b16 %v1858
        %v2019 = vunpack.c.l.b16 %v1859
        %v2020 = vunpack.c.l.b16 %v1860
        %v2021 = vunpack.c.l.b16 %v1861
        %v2022 = vunpack.c.l.b16 %v1862
        %v2023 = vunpack.c.l.b16 %v1863
        %v2024 = vunpack.c.l.b16 %v1864
        %v2025 = vunpack.c.l.b16 %v1865
        %v2026 = vunpack.c.l.b16 %v1866
        %v2027 = vunpack.c.l.b16 %v1867
        %v2028 = vunpack.c.l.b16 %v1868
        %v2029 = vunpack.c.l.b16 %v1869
        %v2030 = vunpack.c.l.b16 %v1870
        %v2031 = vunpack.c.l.b16 %v1871
        %v2032 = vunpack.c.l.b16 %v1872
        %v2033 = vunpack.c.l.b16 %v1873
        %v2034 = vunpack.c.l.b16 %v1874
        %v2035 = vunpack.c.l.b16 %v1875
        %v2036 = vpack.c.b16 %v1989, %v1988
        %v2037 = vpack.c.b16 %v1991, %v1990
        %v2038 = vpack.c.b16 %v1993, %v1992
        %v2039 = vpack.c.b16 %v1995, %v1994
        %v2040 = vpack.c.b16 %v1997, %v1996
        %v2041 = vpack.c.b16 %v1999, %v1998
        %v2042 = vpack.c.b16 %v2001, %v2000
        %v2043 = vpack.c.b16 %v2003, %v2002
        %v2044 = vpack.c.b16 %v2005, %v2004
        %v2045 = vpack.c.b16 %v2007, %v2006
        %v2046 = vpack.c.b16 %v2009, %v2008
        %v2047 = vpack.c.b16 %v2011, %v2010
        %v2048 = vpack.c.b16 %v2013, %v2012
        %v2049 = vpack.c.b16 %v2015, %v2014
        %v2050 = vpack.c.b16 %v2017, %v2016
        %v2051 = vpack.c.b16 %v2019, %v2018
        %v2052 = vpack.c.b16 %v2021, %v2020
        %v2053 = vpack.c.b16 %v2023, %v2022
        %v2054 = vpack.c.b16 %v2025, %v2024
        %v2055 = vpack.c.b16 %v2027, %v2026
        %v2056 = vpack.c.b16 %v2029, %v2028
        %v2057 = vpack.c.b16 %v2031, %v2030
        %v2058 = vpack.c.b16 %v2033, %v2032
        %v2059 = vpack.c.b16 %v2035, %v2034
        %2084 = vmatpush.bf16.msra.mxu0 %v2043
        %2085 = vmatpush.bf16.msra.mxu0 %v2042
        %2086 = vmatpush.bf16.msra.mxu0 %v2041
        %2087 = vmatpush.bf16.msra.mxu0 %v2040
        %2088 = vmatpush.bf16.msra.mxu0 %v2039
        %2089 = vmatpush.bf16.msra.mxu0 %v2038
        %2090 = vmatpush.bf16.msra.mxu0 %v2037
        %2091 = vmatpush.bf16.msra.mxu0 %v2036
        %2092 = vmatmul.bf16.gmra.mxu0 %v1934
        %v2093 = vpop.f32.mrf.mxu0
        %v2094 = vadd.f32 %v1938, %v2093
        %v2095 = vpop.f32.mrf.mxu0
        %v2096 = vadd.f32 %v1938, %v2095
        %2097 = vdwg.mxu0
        %2098 = vmatpush.bf16.msra.mxu0 %v2051
        %2099 = vmatpush.bf16.msra.mxu0 %v2050
        %2100 = vmatpush.bf16.msra.mxu0 %v2049
        %2101 = vmatpush.bf16.msra.mxu0 %v2048
        %2102 = vmatpush.bf16.msra.mxu0 %v2047
        %2103 = vmatpush.bf16.msra.mxu0 %v2046
        %2104 = vmatpush.bf16.msra.mxu0 %v2045
        %2105 = vmatpush.bf16.msra.mxu0 %v2044
        %2106 = vmatmul.bf16.gmra.mxu0 %v1935
        %v2107 = vpop.f32.mrf.mxu0
        %v2108 = vadd.f32 %v2094, %v2107
        %v2109 = vpop.f32.mrf.mxu0
        %v2110 = vadd.f32 %v2096, %v2109
        %2111 = vdwg.mxu0
        %2112 = vmatpush.bf16.msra.mxu0 %v2059
        %2113 = vmatpush.bf16.msra.mxu0 %v2058
        %2114 = vmatpush.bf16.msra.mxu0 %v2057
        %2115 = vmatpush.bf16.msra.mxu0 %v2056
        %2116 = vmatpush.bf16.msra.mxu0 %v2055
        %2117 = vmatpush.bf16.msra.mxu0 %v2054
        %2118 = vmatpush.bf16.msra.mxu0 %v2053
        %2119 = vmatpush.bf16.msra.mxu0 %v2052
        %2120 = vmatmul.bf16.gmra.mxu0 %v1936
        %v2121 = vpop.f32.mrf.mxu0
        %v2122 = vadd.f32 %v2108, %v2121
        %v2123 = vpop.f32.mrf.mxu0
        %v2124 = vadd.f32 %v2110, %v2123
        %2125 = vdwg.mxu0
        %v2126 = vmax.f32 %v2122, 0.0
        %v2127 = vmax.f32 %v2124, 0.0
        %v2130 = vrot.slane %v2126, 4
        %v2131 = vsel %vm1414, %v1415, %v2130
        %v2132 = vrot.slane %v2127, 4
        %v2133 = vsel %vm1414, %v2130, %v2132
        %v2136 = vpack.c.bf16 %v2127, %v2126
        %v2137 = vpack.c.bf16 %v2133, %v2131
        %v2138 = vpack.c.bf16 %v2126, 0.0
        %v2140 = vperm.slane %v1925, 0
        %v2190 = vunpack.c.l.b16 %v1877
        %v2191 = vunpack.c.l.b16 %v1878
        %v2192 = vunpack.c.l.b16 %v1879
        %v2193 = vunpack.c.l.b16 %v1880
        %v2194 = vunpack.c.l.b16 %v1881
        %v2195 = vunpack.c.l.b16 %v1882
        %v2196 = vunpack.c.l.b16 %v1883
        %v2197 = vunpack.c.l.b16 %v1884
        %v2198 = vunpack.c.l.b16 %v1885
        %v2199 = vunpack.c.l.b16 %v1886
        %v2200 = vunpack.c.l.b16 %v1887
        %v2201 = vunpack.c.l.b16 %v1888
        %v2202 = vunpack.c.l.b16 %v1889
        %v2203 = vunpack.c.l.b16 %v1890
        %v2204 = vunpack.c.l.b16 %v1891
        %v2205 = vunpack.c.l.b16 %v1892
        %v2206 = vunpack.c.l.b16 %v1893
        %v2207 = vunpack.c.l.b16 %v1894
        %v2208 = vunpack.c.l.b16 %v1895
        %v2209 = vunpack.c.l.b16 %v1896
        %v2210 = vunpack.c.l.b16 %v1897
        %v2211 = vunpack.c.l.b16 %v1898
        %v2212 = vunpack.c.l.b16 %v1899
        %v2213 = vunpack.c.l.b16 %v1900
        %v2214 = vunpack.c.l.b16 %v1901
        %v2215 = vunpack.c.l.b16 %v1902
        %v2216 = vunpack.c.l.b16 %v1903
        %v2217 = vunpack.c.l.b16 %v1904
        %v2218 = vunpack.c.l.b16 %v1905
        %v2219 = vunpack.c.l.b16 %v1906
        %v2220 = vunpack.c.l.b16 %v1907
        %v2221 = vunpack.c.l.b16 %v1908
        %v2222 = vunpack.c.l.b16 %v1909
        %v2223 = vunpack.c.l.b16 %v1910
        %v2224 = vunpack.c.l.b16 %v1911
        %v2225 = vunpack.c.l.b16 %v1912
        %v2226 = vunpack.c.l.b16 %v1913
        %v2227 = vunpack.c.l.b16 %v1914
        %v2228 = vunpack.c.l.b16 %v1915
        %v2229 = vunpack.c.l.b16 %v1916
        %v2230 = vunpack.c.l.b16 %v1917
        %v2231 = vunpack.c.l.b16 %v1918
        %v2232 = vunpack.c.l.b16 %v1919
        %v2233 = vunpack.c.l.b16 %v1920
        %v2234 = vunpack.c.l.b16 %v1921
        %v2235 = vunpack.c.l.b16 %v1922
        %v2236 = vunpack.c.l.b16 %v1923
        %v2237 = vunpack.c.l.b16 %v1924
        %v2238 = vpack.c.b16 %v2191, %v2190
        %v2239 = vpack.c.b16 %v2193, %v2192
        %v2240 = vpack.c.b16 %v2195, %v2194
        %v2241 = vpack.c.b16 %v2197, %v2196
        %v2242 = vpack.c.b16 %v2199, %v2198
        %v2243 = vpack.c.b16 %v2201, %v2200
        %v2244 = vpack.c.b16 %v2203, %v2202
        %v2245 = vpack.c.b16 %v2205, %v2204
        %v2246 = vpack.c.b16 %v2207, %v2206
        %v2247 = vpack.c.b16 %v2209, %v2208
        %v2248 = vpack.c.b16 %v2211, %v2210
        %v2249 = vpack.c.b16 %v2213, %v2212
        %v2250 = vpack.c.b16 %v2215, %v2214
        %v2251 = vpack.c.b16 %v2217, %v2216
        %v2252 = vpack.c.b16 %v2219, %v2218
        %v2253 = vpack.c.b16 %v2221, %v2220
        %v2254 = vpack.c.b16 %v2223, %v2222
        %v2255 = vpack.c.b16 %v2225, %v2224
        %v2256 = vpack.c.b16 %v2227, %v2226
        %v2257 = vpack.c.b16 %v2229, %v2228
        %v2258 = vpack.c.b16 %v2231, %v2230
        %v2259 = vpack.c.b16 %v2233, %v2232
        %v2260 = vpack.c.b16 %v2235, %v2234
        %v2261 = vpack.c.b16 %v2237, %v2236
        %2286 = vmatpush.bf16.msra.mxu0 %v2245
        %2287 = vmatpush.bf16.msra.mxu0 %v2244
        %2288 = vmatpush.bf16.msra.mxu0 %v2243
        %2289 = vmatpush.bf16.msra.mxu0 %v2242
        %2290 = vmatpush.bf16.msra.mxu0 %v2241
        %2291 = vmatpush.bf16.msra.mxu0 %v2240
        %2292 = vmatpush.bf16.msra.mxu0 %v2239
        %2293 = vmatpush.bf16.msra.mxu0 %v2238
        %2294 = vmatmul.bf16.gmra.mxu0 %v2136
        %v2295 = vpop.f32.mrf.mxu0
        %v2296 = vadd.f32 %v2140, %v2295
        %v2297 = vpop.f32.mrf.mxu0
        %v2298 = vadd.f32 %v2140, %v2297
        %2299 = vdwg.mxu0
        %2300 = vmatpush.bf16.msra.mxu0 %v2253
        %2301 = vmatpush.bf16.msra.mxu0 %v2252
        %2302 = vmatpush.bf16.msra.mxu0 %v2251
        %2303 = vmatpush.bf16.msra.mxu0 %v2250
        %2304 = vmatpush.bf16.msra.mxu0 %v2249
        %2305 = vmatpush.bf16.msra.mxu0 %v2248
        %2306 = vmatpush.bf16.msra.mxu0 %v2247
        %2307 = vmatpush.bf16.msra.mxu0 %v2246
        %2308 = vmatmul.bf16.gmra.mxu0 %v2137
        %v2309 = vpop.f32.mrf.mxu0
        %v2310 = vadd.f32 %v2296, %v2309
        %v2311 = vpop.f32.mrf.mxu0
        %v2312 = vadd.f32 %v2298, %v2311
        %2313 = vdwg.mxu0
        %2314 = vmatpush.bf16.msra.mxu0 %v2261
        %2315 = vmatpush.bf16.msra.mxu0 %v2260
        %2316 = vmatpush.bf16.msra.mxu0 %v2259
        %2317 = vmatpush.bf16.msra.mxu0 %v2258
        %2318 = vmatpush.bf16.msra.mxu0 %v2257
        %2319 = vmatpush.bf16.msra.mxu0 %v2256
        %2320 = vmatpush.bf16.msra.mxu0 %v2255
        %2321 = vmatpush.bf16.msra.mxu0 %v2254
        %2322 = vmatmul.bf16.gmra.mxu0 %v2138
        %v2323 = vpop.f32.mrf.mxu0
        %v2324 = vadd.f32 %v2310, %v2323
        %v2325 = vpop.f32.mrf.mxu0
        %v2326 = vadd.f32 %v2312, %v2325
        %2327 = vdwg.mxu0
        %v2328 = vmax.f32 %v2324, 0.0
        %v2329 = vmax.f32 %v2326, 0.0
        %v2330 = vld [vmem:[#allocation16] sm:$0xf]
        %v2331 = vld [vmem:[#allocation16 + $0x4] sm:$0xf]
        %v2332 = vld [vmem:[#allocation16 + $0x8] sm:$0xf]
        %v2333 = vld [vmem:[#allocation16 + $0xc] sm:$0xf]
        %v2334 = vld [vmem:[#allocation16 + $0x10] sm:$0xf]
        %v2335 = vld [vmem:[#allocation16 + $0x14] sm:$0xf]
        %v2336 = vld [vmem:[#allocation16 + $0x18] sm:$0xf]
        %v2337 = vld [vmem:[#allocation16 + $0x1c] sm:$0xf]
        %v2338 = vld [vmem:[#allocation16 + $0x20] sm:$0xf]
        %v2339 = vld [vmem:[#allocation16 + $0x24] sm:$0xf]
        %v2340 = vld [vmem:[#allocation16 + $0x28] sm:$0xf]
        %v2341 = vld [vmem:[#allocation16 + $0x2c] sm:$0xf]
        %v2342 = vld [vmem:[#allocation16 + $0x30] sm:$0xf]
        %v2343 = vld [vmem:[#allocation16 + $0x34] sm:$0xf]
        %v2344 = vld [vmem:[#allocation16 + $0x38] sm:$0xf]
        %v2345 = vld [vmem:[#allocation16 + $0x3c] sm:$0xf]
        %v2346 = vld [vmem:[%s16] sm:$0x1]
        %v2348 = vperm.slane %v2346, 0
        %v2366 = vunpack.c.l.b16 %v2330
        %v2367 = vunpack.c.l.b16 %v2331
        %v2368 = vunpack.c.l.b16 %v2332
        %v2369 = vunpack.c.l.b16 %v2333
        %v2370 = vunpack.c.l.b16 %v2334
        %v2371 = vunpack.c.l.b16 %v2335
        %v2372 = vunpack.c.l.b16 %v2336
        %v2373 = vunpack.c.l.b16 %v2337
        %v2374 = vunpack.c.l.b16 %v2338
        %v2375 = vunpack.c.l.b16 %v2339
        %v2376 = vunpack.c.l.b16 %v2340
        %v2377 = vunpack.c.l.b16 %v2341
        %v2378 = vunpack.c.l.b16 %v2342
        %v2379 = vunpack.c.l.b16 %v2343
        %v2380 = vunpack.c.l.b16 %v2344
        %v2381 = vunpack.c.l.b16 %v2345
        %v2382 = vpack.c.b16 %v2367, %v2366
        %v2383 = vpack.c.b16 %v2369, %v2368
        %v2384 = vpack.c.b16 %v2371, %v2370
        %v2385 = vpack.c.b16 %v2373, %v2372
        %v2386 = vpack.c.b16 %v2375, %v2374
        %v2387 = vpack.c.b16 %v2377, %v2376
        %v2388 = vpack.c.b16 %v2379, %v2378
        %v2389 = vpack.c.b16 %v2381, %v2380
        %2398 = vmatpush.bf16.msra.mxu0 %v2389
        %2399 = vmatpush.bf16.msra.mxu0 %v2388
        %2400 = vmatpush.bf16.msra.mxu0 %v2387
        %2401 = vmatpush.bf16.msra.mxu0 %v2386
        %2402 = vmatpush.bf16.msra.mxu0 %v2385
        %2403 = vmatpush.bf16.msra.mxu0 %v2384
        %2404 = vmatpush.bf16.msra.mxu0 %v2383
        %2405 = vmatpush.bf16.msra.mxu0 %v2382
        %2406 = vmatmul.bf16.gmra.mxu0 %v1934
        %v2407 = vpop.f32.mrf.mxu0
        %v2408 = vadd.f32 %v2348, %v2407
        %v2409 = vpop.f32.mrf.mxu0
        %v2410 = vadd.f32 %v2348, %v2409
        %2411 = vdwg.mxu0
        %v2412 = vadd.f32 %v2328, %v2408
        %v2413 = vadd.f32 %v2329, %v2410
        %v2414 = vmax.f32 %v2412, 0.0
        %v2415 = vmax.f32 %v2413, 0.0
        %2416 = vst [vmem:[%s700] sm:$0xff] %v2414
        %2417 = vst [vmem:[%s700 + $0x8] sm:$0xff] %v2415
        %s2418 = sand.u32 %s408, 1
        %s2419 = scalar_lea.sflag [#allocation4], %s2418
        %s2420 = sand.u32 %s408, 1
        %s2421 = smul.addr %s2420, 16
        %s2422 = scalar_lea.vmem [#allocation17], %s2421
        // Predicated region
        $region125: #{tpu_custom_call.1} parent=87 // pred_check
          %p2423 = pneg %p418
        $region126: #{tpu_custom_call.1} parent=87 // pred_check_branch
          %2425 = sbr.rel (%p2423) target = $region128
        $region127: #{tpu_custom_call.1} parent=87 // pred_region
          %2427 = vsyncadd %s2419, 0
          %s2428 = smul.addr %s38, 2
          %s2429 = smul.addr %s2428, 8
          %s2430 = scalar_lea.hbm %s17, %s2429
          %s2431 = sshll.u32 %s2422, 4
          %s2432 = int_to_ptr.vmem [resolvable:$true] %s2431
          %s2433 = sshll.u32 %s2430, 4
          %s2434 = int_to_ptr.hbm [resolvable:$true] %s2433
          %2439 = dma.vmem_to_hbm [thread:$0]  %s2432, 256, %s2434, %s2419, 128, 128, 8
        $region128: #{tpu_custom_call.1} parent=87 // pred_fallthru
          _
      $region88: #{tpu_custom_call.1} parent=5 // pred_fallthru
        _
      %p2440 = scmp.le.s32.totalorder 2, %s33
      // Predicated region
      $region129: #{tpu_custom_call.1} parent=5 // pred_check
        %p2441 = pneg %p2440
      $region130: #{tpu_custom_call.1} parent=5 // pred_check_branch
        %2443 = sbr.rel (%p2441) target = $region132
      $region131: #{tpu_custom_call.1} parent=5 // pred_region
        %s2444 = ssub.s32 %s33, 2
        // Predicated region
        $region133: #{tpu_custom_call.1} parent=131 // pred_check
          %p2445 = pneg %p424
        $region134: #{tpu_custom_call.1} parent=131 // pred_check_branch
          %2447 = sbr.rel (%p2445) target = $region136
        $region135: #{tpu_custom_call.1} parent=131 // pred_region
          %s2448 = sand.u32 %s409, 1
          %s2449 = scalar_lea.sflag [#allocation4], %s2448
          %s2450 = sand.u32 %s409, 1
          %s2451 = smul.addr %s2450, 16
          %s2452 = scalar_lea.vmem [#allocation17], %s2451
          %2454 = dma.done %s2449, 256
        $region136: #{tpu_custom_call.1} parent=131 // pred_fallthru
          _
      $region132: #{tpu_custom_call.1} parent=5 // pred_fallthru
        _
    $region6: #{tpu_custom_call.1} parent=1 // loop_footer
      %s37 = sadd.s32 1, %s33
    $region7: #{tpu_custom_call.1} parent=1 // loop_footer_branch
      %32 = sbr.rel target = $region3
    $region8: #{tpu_custom_call.1} parent=1 // loop_exit
      _
    %2455 = vsyncpa [#allocation3], 1
    %s2456 = scalar_lea.sflag [#allocation3], 1
    %2457 = vsyncpa %s2456, 1
    %2458 = vsyncpa [#allocation6], 1
    %2459 = vsyncpa [#allocation9], 1
    %2460 = vsyncpa [#allocation12], 1
    %2461 = vsyncpa [#allocation15], 1
    %2462 = vsyncpa [#allocation4], 1
    %s2463 = scalar_lea.sflag [#allocation4], 1
    %2464 = vsyncpa %s2463, 1

</llo_original>
